<compile_context>
chip_gen: v7x
topology: tpu7x:2x2x1
jax: 0.10.0
libtpu: 0.0.40
codegen_flags: <defaults>
</compile_context>

<pallas_src>
import functools

import jax
import jax.numpy as jnp
import numpy as np
from jax import lax
from jax.experimental import pallas as pl
from jax.experimental.pallas import tpu as pltpu


# ----------------------------- Pallas kernel ------------------------------- #
def _linear_attention_kernel(x_ref, wq_ref, wk_ref, wv_ref, wout_t_ref, bout_ref, g2s_ref,
                             o_ref, *, heads, dim_head, scale, n_valid):
    dim, n_pad = x_ref.shape
    hidden = heads * dim_head

    x = x_ref[...].astype(jnp.float32)                                    # (dim, Np)

    # --- RMSNorm #1: x / max(||x||_2, 1e-12); g1*sqrt(dim) is folded into w_qkv ---
    inv1 = lax.rsqrt(jnp.maximum(jnp.sum(x * x, axis=0, keepdims=True), 1e-24))  # (1, Np)
    xn = x * inv1                                                          # (dim, Np)

    # --- head-fused qkv projection: three (hidden, dim) x (dim, Np) matmuls ---
    q_all = jnp.dot(wq_ref[...], xn, preferred_element_type=jnp.float32)  # (hidden, Np)
    k_all = jnp.dot(wk_ref[...], xn, preferred_element_type=jnp.float32)  # (hidden, Np)
    v_all = jnp.dot(wv_ref[...], xn, preferred_element_type=jnp.float32)  # (hidden, Np)

    # mask for padded spatial positions (only materialized if padding was needed)
    lane_mask = None
    if n_valid < n_pad:
        lane = lax.broadcasted_iota(jnp.int32, (dim_head, n_pad), 1)
        lane_mask = lane < n_valid

    qe_parts = []
    m_parts = []
    for hh in range(heads):
        s = hh * dim_head
        qh = q_all[s:s + dim_head, :]                                      # (d, Np)
        kh = k_all[s:s + dim_head, :]                                      # (d, Np)
        vh = v_all[s:s + dim_head, :]                                      # (e, Np)

        # q softmax over head-dim (sublane axis); exact denominator (accuracy-critical).
        qe = jnp.exp(qh - jnp.max(qh, axis=0, keepdims=True))              # (d, Np)
        inv_dq = 1.0 / jnp.sum(qe, axis=0, keepdims=True)                  # (1, Np)
        qe_parts.append(qe * inv_dq)

        # k softmax over the spatial (lane) axis; padded lanes masked out of the sum.
        ke = jnp.exp(kh - jnp.max(kh, axis=-1, keepdims=True))             # (d, Np)
        if lane_mask is not None:
            ke = jnp.where(lane_mask, ke, 0.0)
        dk = jnp.sum(ke, axis=-1, keepdims=True)                           # (d, 1)

        # ctx_raw[d, e] = sum_n ke[d, n] * vh[e, n]
        ctx_raw = lax.dot_general(ke, vh, (((1,), (1,)), ((), ())),
                                  preferred_element_type=jnp.float32)      # (d, e)

        # m_t[d, c] = (scale / dk[d]) * sum_e ctx_raw[d, e] * w_out[c, e_global]
        m_t = jnp.dot(ctx_raw, wout_t_ref[s:s + dim_head, :],
                      preferred_element_type=jnp.float32)                  # (d, dim)
        m_parts.append(m_t * (scale / dk))

    # Fused output projection across heads: single K=hidden contraction.
    qe_all = jnp.concatenate(qe_parts, axis=0)                             # (hidden, Np)
    m_all = jnp.concatenate(m_parts, axis=0)                               # (hidden, dim)
    y = lax.dot_general(m_all, qe_all, (((0,), (0,)), ((), ())),
                        preferred_element_type=jnp.float32)                # (dim, Np)

    # --- to_out bias, then RMSNorm #2 (g2*sqrt(dim) precomputed in wrapper) ---
    y = y + bout_ref[...]
    inv2 = lax.rsqrt(jnp.maximum(jnp.sum(y * y, axis=0, keepdims=True), 1e-24))   # (1, Np)
    o_ref[...] = (y * inv2 * g2s_ref[...]).astype(o_ref.dtype)


# ------------------------------- wrapper ----------------------------------- #
def linear_attention(x_nchw, w_qkv, g1, w_out, b_out, g2, *, heads=4, dim_head=32):
    b, c, h, w = x_nchw.shape
    N = h * w
    hidden = heads * dim_head
    scale = dim_head ** (-0.5)
    sqrt_dim = float(c) ** 0.5

    # Lane-dense spatial axis: pad N up to a multiple of 128 (masked in-kernel, trimmed after).
    n_pad = int(pl.cdiv(N, 128)) * 128
    x = x_nchw.reshape(b, c, N)
    if n_pad != N:
        x = jnp.pad(x, ((0, 0), (0, 0), (0, n_pad - N)))

    # Wrapper-side (free) weight folding / layout prep:
    #  - fold RMSNorm#1 gain into the qkv projection weights, split per q/k/v,
    #  - transpose w_out to (hidden, dim) so per-head slices are sublane-aligned,
    #  - pre-scale g2 by sqrt(dim).
    w_qkv_s = (w_qkv * (g1 * sqrt_dim)[None, :]).astype(jnp.float32)       # (3*hidden, c)
    wq = w_qkv_s[:hidden]
    wk = w_qkv_s[hidden:2 * hidden]
    wv = w_qkv_s[2 * hidden:]
    w_out_t = jnp.transpose(w_out).astype(jnp.float32)                     # (hidden, c)
    bout_2d = b_out.reshape(c, 1).astype(jnp.float32)
    g2s_2d = (g2 * sqrt_dim).reshape(c, 1).astype(jnp.float32)

    kernel = functools.partial(_linear_attention_kernel,
                               heads=heads, dim_head=dim_head, scale=scale, n_valid=N)

    # Advisory cost estimate (helps XLA overlap this small kernel with neighbors).
    flops_per_b = (2 * n_pad * 3 * hidden * c                 # qkv projection
                   + heads * 2 * n_pad * dim_head * dim_head  # ctx
                   + heads * 2 * dim_head * dim_head * c      # m_t
                   + 2 * n_pad * hidden * c)                  # fused output projection
    cost = pl.CostEstimate(
        flops=int(b * flops_per_b),
        transcendentals=int(b * (2 * hidden * n_pad + 4 * n_pad)),
        bytes_accessed=int(2 * b * c * n_pad * 4
                           + 4 * (w_qkv_s.size + w_out_t.size + 2 * c)),
    )

    out = pl.pallas_call(
        kernel,
        out_shape=jax.ShapeDtypeStruct((b, c, n_pad), x_nchw.dtype),
        grid_spec=pltpu.PrefetchScalarGridSpec(
            num_scalar_prefetch=0,
            grid=(b,),
            in_specs=[
                pl.BlockSpec((pl.Squeezed(), c, n_pad), lambda i: (i, 0, 0)),  # x
                pl.BlockSpec((hidden, c), lambda i: (0, 0)),                   # w_q (g1 folded)
                pl.BlockSpec((hidden, c), lambda i: (0, 0)),                   # w_k (g1 folded)
                pl.BlockSpec((hidden, c), lambda i: (0, 0)),                   # w_v (g1 folded)
                pl.BlockSpec((hidden, c), lambda i: (0, 0)),                   # w_out^T
                pl.BlockSpec((c, 1), lambda i: (0, 0)),                        # b_out
                pl.BlockSpec((c, 1), lambda i: (0, 0)),                        # g2 * sqrt(dim)
            ],
            out_specs=pl.BlockSpec((pl.Squeezed(), c, n_pad), lambda i: (i, 0, 0)),
        ),
        compiler_params=pltpu.CompilerParams(dimension_semantics=("parallel",)),
        cost_estimate=cost,
    )(x, wq, wk, wv, w_out_t, bout_2d, g2s_2d)

    if n_pad != N:
        out = out[:, :, :N]
    return out.reshape(b, c, h, w)


# ---------------------------- pure-JAX reference ---------------------------- #
def linear_attention_ref(x, w_qkv, g1, w_out, b_out, g2, *, heads=4, dim_head=32):
    b, c, h, w = x.shape
    scale = dim_head ** (-0.5)
    n = jnp.sqrt(jnp.sum(x * x, axis=1, keepdims=True))
    xn = x / jnp.maximum(n, 1e-12) * g1.reshape(1, c, 1, 1) * (c ** 0.5)
    qkv = jnp.einsum('oc,bchw->bohw', w_qkv, xn)
    q, k, v = jnp.split(qkv, 3, axis=1)
    q, k, v = (t.reshape(b, heads, dim_head, h * w) for t in (q, k, v))
    q = jax.nn.softmax(q, axis=-2) * scale
    k = jax.nn.softmax(k, axis=-1)
    ctx = jnp.einsum('bhdn,bhen->bhde', k, v)
    out = jnp.einsum('bhde,bhdn->bhen', ctx, q)
    out = out.reshape(b, heads * dim_head, h, w)
    y = jnp.einsum('oc,bchw->bohw', w_out, out) + b_out.reshape(1, c, 1, 1)
    ny = jnp.sqrt(jnp.sum(y * y, axis=1, keepdims=True))
    return y / jnp.maximum(ny, 1e-12) * g2.reshape(1, c, 1, 1) * (c ** 0.5)


# ----------------------------------- main ----------------------------------- #
if __name__ == "__main__":
    dim, heads, dim_head = 4, 4, 32
    hidden = heads * dim_head
    b, h, w = 2, 16, 16

    key = jax.random.PRNGKey(0)
    kx, kqkv, kout, kb = jax.random.split(key, 4)

    x = jax.random.normal(kx, (b, dim, h, w), dtype=jnp.float32)

    # Deterministic parameter init (shapes match the PyTorch module's __init__).
    w_qkv = jax.random.normal(kqkv, (hidden * 3, dim), dtype=jnp.float32) * (1.0 / np.sqrt(dim))
    w_out = jax.random.normal(kout, (dim, hidden), dtype=jnp.float32) * (1.0 / np.sqrt(hidden))
    b_out = jax.random.normal(kb, (dim,), dtype=jnp.float32) * 0.1
    g1 = jnp.ones((dim,), dtype=jnp.float32)   # RMSNorm g (PyTorch init: ones)
    g2 = jnp.ones((dim,), dtype=jnp.float32)   # RMSNorm g inside to_out

    out = linear_attention(x, w_qkv, g1, w_out, b_out, g2, heads=heads, dim_head=dim_head)
    out = jax.block_until_ready(out)

    ref = linear_attention_ref(x, w_qkv, g1, w_out, b_out, g2, heads=heads, dim_head=dim_head)
    np.testing.assert_allclose(np.asarray(out), np.asarray(ref), rtol=2e-4, atol=2e-4)

    print("KERNEL_OK")
</pallas_src>

<mosaic_0001>
module attributes {stable_mosaic.version = 11 : i64} {
  func.func @_linear_attention_kernel(%arg0: i32, %arg1: memref<1x4x256xf32, #tpu.memory_space<vmem>>, %arg2: memref<128x4xf32, #tpu.memory_space<vmem>>, %arg3: memref<128x4xf32, #tpu.memory_space<vmem>>, %arg4: memref<128x4xf32, #tpu.memory_space<vmem>>, %arg5: memref<128x4xf32, #tpu.memory_space<vmem>>, %arg6: memref<4x1xf32, #tpu.memory_space<vmem>>, %arg7: memref<4x1xf32, #tpu.memory_space<vmem>>, %arg8: memref<1x4x256xf32, #tpu.memory_space<vmem>>) attributes {dimension_semantics = [#tpu.dimension_semantics<parallel>], iteration_bounds = array<i64: 2>, scalar_prefetch = 0 : i64, scratch_operands = 0 : i64, tpu.core_type = #tpu.core_type<tc>, window_params = [{transform_indices = @transform_0, window_bounds = array<i64: 1, 4, 256>}, {pipeline_mode = #tpu.pipeline_mode<synchronous>, transform_indices = @transform_1, window_bounds = array<i64: 128, 4>}, {pipeline_mode = #tpu.pipeline_mode<synchronous>, transform_indices = @transform_2, window_bounds = array<i64: 128, 4>}, {pipeline_mode = #tpu.pipeline_mode<synchronous>, transform_indices = @transform_3, window_bounds = array<i64: 128, 4>}, {pipeline_mode = #tpu.pipeline_mode<synchronous>, transform_indices = @transform_4, window_bounds = array<i64: 128, 4>}, {pipeline_mode = #tpu.pipeline_mode<synchronous>, transform_indices = @transform_5, window_bounds = array<i64: 4, 1>}, {pipeline_mode = #tpu.pipeline_mode<synchronous>, transform_indices = @transform_6, window_bounds = array<i64: 4, 1>}, {transform_indices = @transform_7, window_bounds = array<i64: 1, 4, 256>}]} {
    %c0 = arith.constant 0 : index
    %c0_0 = arith.constant 0 : index
    %c0_1 = arith.constant 0 : index
    %0 = vector.load %arg1[%c0, %c0_0, %c0_1] : memref<1x4x256xf32, #tpu.memory_space<vmem>>, vector<1x4x256xf32>
    %1 = vector.shape_cast %0 : vector<1x4x256xf32> to vector<4x256xf32>
    %2 = arith.mulf %1, %1 : vector<4x256xf32>
    %cst = arith.constant dense<0.000000e+00> : vector<256xf32>
    %3 = vector.multi_reduction <add>, %2, %cst [0] : vector<4x256xf32> to vector<256xf32>
    %4 = vector.shape_cast %3 : vector<256xf32> to vector<1x256xf32>
    %cst_2 = arith.constant 1.000000e-24 : f32
    %5 = vector.broadcast %cst_2 : f32 to vector<1x256xf32>
    %6 = arith.maximumf %4, %5 : vector<1x256xf32>
    %7 = math.rsqrt %6 : vector<1x256xf32>
    %8 = vector.broadcast %7 : vector<1x256xf32> to vector<4x256xf32>
    %9 = arith.mulf %1, %8 : vector<4x256xf32>
    %c0_3 = arith.constant 0 : index
    %c0_4 = arith.constant 0 : index
    %10 = vector.load %arg2[%c0_3, %c0_4] : memref<128x4xf32, #tpu.memory_space<vmem>>, vector<128x4xf32>
    %cst_5 = arith.constant dense<0.000000e+00> : vector<128x256xf32>
    %11 = tpu.matmul %10, %9, %cst_5 {dimension_numbers = #tpu.dot_dimension_numbers<[1], [0], [0], [1], [0, 0, 1, 1], [], []>} : vector<128x4xf32>, vector<4x256xf32>, vector<128x256xf32> -> vector<128x256xf32>
    %c0_6 = arith.constant 0 : index
    %c0_7 = arith.constant 0 : index
    %12 = vector.load %arg3[%c0_6, %c0_7] : memref<128x4xf32, #tpu.memory_space<vmem>>, vector<128x4xf32>
    %cst_8 = arith.constant dense<0.000000e+00> : vector<128x256xf32>
    %13 = tpu.matmul %12, %9, %cst_8 {dimension_numbers = #tpu.dot_dimension_numbers<[1], [0], [0], [1], [0, 0, 1, 1], [], []>} : vector<128x4xf32>, vector<4x256xf32>, vector<128x256xf32> -> vector<128x256xf32>
    %c0_9 = arith.constant 0 : index
    %c0_10 = arith.constant 0 : index
    %14 = vector.load %arg4[%c0_9, %c0_10] : memref<128x4xf32, #tpu.memory_space<vmem>>, vector<128x4xf32>
    %cst_11 = arith.constant dense<0.000000e+00> : vector<128x256xf32>
    %15 = tpu.matmul %14, %9, %cst_11 {dimension_numbers = #tpu.dot_dimension_numbers<[1], [0], [0], [1], [0, 0, 1, 1], [], []>} : vector<128x4xf32>, vector<4x256xf32>, vector<128x256xf32> -> vector<128x256xf32>
    %16 = vector.extract_strided_slice %11 {offsets = [0, 0], sizes = [32, 256], strides = [1, 1]} : vector<128x256xf32> to vector<32x256xf32>
    %17 = vector.extract_strided_slice %13 {offsets = [0, 0], sizes = [32, 256], strides = [1, 1]} : vector<128x256xf32> to vector<32x256xf32>
    %18 = vector.extract_strided_slice %15 {offsets = [0, 0], sizes = [32, 256], strides = [1, 1]} : vector<128x256xf32> to vector<32x256xf32>
    %cst_12 = arith.constant dense<0xFF800000> : vector<256xf32>
    %19 = vector.multi_reduction <maximumf>, %16, %cst_12 [0] : vector<32x256xf32> to vector<256xf32>
    %20 = vector.shape_cast %19 : vector<256xf32> to vector<1x256xf32>
    %21 = vector.broadcast %20 : vector<1x256xf32> to vector<32x256xf32>
    %22 = arith.subf %16, %21 : vector<32x256xf32>
    %23 = math.exp %22 : vector<32x256xf32>
    %cst_13 = arith.constant dense<0.000000e+00> : vector<256xf32>
    %24 = vector.multi_reduction <add>, %23, %cst_13 [0] : vector<32x256xf32> to vector<256xf32>
    %25 = vector.shape_cast %24 : vector<256xf32> to vector<1x256xf32>
    %cst_14 = arith.constant 1.000000e+00 : f32
    %26 = vector.broadcast %cst_14 : f32 to vector<1x256xf32>
    %27 = arith.divf %26, %25 : vector<1x256xf32>
    %28 = vector.broadcast %27 : vector<1x256xf32> to vector<32x256xf32>
    %29 = arith.mulf %23, %28 : vector<32x256xf32>
    %cst_15 = arith.constant dense<0xFF800000> : vector<32xf32>
    %30 = vector.multi_reduction <maximumf>, %17, %cst_15 [1] : vector<32x256xf32> to vector<32xf32>
    %31 = vector.shape_cast %30 : vector<32xf32> to vector<32x1xf32>
    %32 = vector.broadcast %31 : vector<32x1xf32> to vector<32x256xf32>
    %33 = arith.subf %17, %32 : vector<32x256xf32>
    %34 = math.exp %33 : vector<32x256xf32>
    %cst_16 = arith.constant dense<0.000000e+00> : vector<32xf32>
    %35 = vector.multi_reduction <add>, %34, %cst_16 [1] : vector<32x256xf32> to vector<32xf32>
    %36 = vector.shape_cast %35 : vector<32xf32> to vector<32x1xf32>
    %cst_17 = arith.constant dense<0.000000e+00> : vector<32x32xf32>
    %37 = tpu.matmul %34, %18, %cst_17 {dimension_numbers = #tpu.dot_dimension_numbers<[1], [1], [0], [0], [0, 0, 1, 0], [], []>} : vector<32x256xf32>, vector<32x256xf32>, vector<32x32xf32> -> vector<32x32xf32>
    %c0_18 = arith.constant 0 : index
    %c0_19 = arith.constant 0 : index
    %38 = vector.load %arg5[%c0_18, %c0_19] : memref<128x4xf32, #tpu.memory_space<vmem>>, vector<32x4xf32>
    %cst_20 = arith.constant dense<0.000000e+00> : vector<32x4xf32>
    %39 = tpu.matmul %37, %38, %cst_20 {dimension_numbers = #tpu.dot_dimension_numbers<[1], [0], [0], [1], [0, 0, 1, 1], [], []>} : vector<32x32xf32>, vector<32x4xf32>, vector<32x4xf32> -> vector<32x4xf32>
    %cst_21 = arith.constant 0.176776692 : f32
    %40 = vector.broadcast %cst_21 : f32 to vector<32x1xf32>
    %41 = arith.divf %40, %36 : vector<32x1xf32>
    %42 = vector.broadcast %41 : vector<32x1xf32> to vector<32x4xf32>
    %43 = arith.mulf %39, %42 : vector<32x4xf32>
    %44 = vector.extract_strided_slice %11 {offsets = [32, 0], sizes = [32, 256], strides = [1, 1]} : vector<128x256xf32> to vector<32x256xf32>
    %45 = vector.extract_strided_slice %13 {offsets = [32, 0], sizes = [32, 256], strides = [1, 1]} : vector<128x256xf32> to vector<32x256xf32>
    %46 = vector.extract_strided_slice %15 {offsets = [32, 0], sizes = [32, 256], strides = [1, 1]} : vector<128x256xf32> to vector<32x256xf32>
    %cst_22 = arith.constant dense<0xFF800000> : vector<256xf32>
    %47 = vector.multi_reduction <maximumf>, %44, %cst_22 [0] : vector<32x256xf32> to vector<256xf32>
    %48 = vector.shape_cast %47 : vector<256xf32> to vector<1x256xf32>
    %49 = vector.broadcast %48 : vector<1x256xf32> to vector<32x256xf32>
    %50 = arith.subf %44, %49 : vector<32x256xf32>
    %51 = math.exp %50 : vector<32x256xf32>
    %cst_23 = arith.constant dense<0.000000e+00> : vector<256xf32>
    %52 = vector.multi_reduction <add>, %51, %cst_23 [0] : vector<32x256xf32> to vector<256xf32>
    %53 = vector.shape_cast %52 : vector<256xf32> to vector<1x256xf32>
    %cst_24 = arith.constant 1.000000e+00 : f32
    %54 = vector.broadcast %cst_24 : f32 to vector<1x256xf32>
    %55 = arith.divf %54, %53 : vector<1x256xf32>
    %56 = vector.broadcast %55 : vector<1x256xf32> to vector<32x256xf32>
    %57 = arith.mulf %51, %56 : vector<32x256xf32>
    %cst_25 = arith.constant dense<0xFF800000> : vector<32xf32>
    %58 = vector.multi_reduction <maximumf>, %45, %cst_25 [1] : vector<32x256xf32> to vector<32xf32>
    %59 = vector.shape_cast %58 : vector<32xf32> to vector<32x1xf32>
    %60 = vector.broadcast %59 : vector<32x1xf32> to vector<32x256xf32>
    %61 = arith.subf %45, %60 : vector<32x256xf32>
    %62 = math.exp %61 : vector<32x256xf32>
    %cst_26 = arith.constant dense<0.000000e+00> : vector<32xf32>
    %63 = vector.multi_reduction <add>, %62, %cst_26 [1] : vector<32x256xf32> to vector<32xf32>
    %64 = vector.shape_cast %63 : vector<32xf32> to vector<32x1xf32>
    %cst_27 = arith.constant dense<0.000000e+00> : vector<32x32xf32>
    %65 = tpu.matmul %62, %46, %cst_27 {dimension_numbers = #tpu.dot_dimension_numbers<[1], [1], [0], [0], [0, 0, 1, 0], [], []>} : vector<32x256xf32>, vector<32x256xf32>, vector<32x32xf32> -> vector<32x32xf32>
    %c32 = arith.constant 32 : index
    %c0_28 = arith.constant 0 : index
    %66 = vector.load %arg5[%c32, %c0_28] : memref<128x4xf32, #tpu.memory_space<vmem>>, vector<32x4xf32>
    %cst_29 = arith.constant dense<0.000000e+00> : vector<32x4xf32>
    %67 = tpu.matmul %65, %66, %cst_29 {dimension_numbers = #tpu.dot_dimension_numbers<[1], [0], [0], [1], [0, 0, 1, 1], [], []>} : vector<32x32xf32>, vector<32x4xf32>, vector<32x4xf32> -> vector<32x4xf32>
    %cst_30 = arith.constant 0.176776692 : f32
    %68 = vector.broadcast %cst_30 : f32 to vector<32x1xf32>
    %69 = arith.divf %68, %64 : vector<32x1xf32>
    %70 = vector.broadcast %69 : vector<32x1xf32> to vector<32x4xf32>
    %71 = arith.mulf %67, %70 : vector<32x4xf32>
    %72 = vector.extract_strided_slice %11 {offsets = [64, 0], sizes = [32, 256], strides = [1, 1]} : vector<128x256xf32> to vector<32x256xf32>
    %73 = vector.extract_strided_slice %13 {offsets = [64, 0], sizes = [32, 256], strides = [1, 1]} : vector<128x256xf32> to vector<32x256xf32>
    %74 = vector.extract_strided_slice %15 {offsets = [64, 0], sizes = [32, 256], strides = [1, 1]} : vector<128x256xf32> to vector<32x256xf32>
    %cst_31 = arith.constant dense<0xFF800000> : vector<256xf32>
    %75 = vector.multi_reduction <maximumf>, %72, %cst_31 [0] : vector<32x256xf32> to vector<256xf32>
    %76 = vector.shape_cast %75 : vector<256xf32> to vector<1x256xf32>
    %77 = vector.broadcast %76 : vector<1x256xf32> to vector<32x256xf32>
    %78 = arith.subf %72, %77 : vector<32x256xf32>
    %79 = math.exp %78 : vector<32x256xf32>
    %cst_32 = arith.constant dense<0.000000e+00> : vector<256xf32>
    %80 = vector.multi_reduction <add>, %79, %cst_32 [0] : vector<32x256xf32> to vector<256xf32>
    %81 = vector.shape_cast %80 : vector<256xf32> to vector<1x256xf32>
    %cst_33 = arith.constant 1.000000e+00 : f32
    %82 = vector.broadcast %cst_33 : f32 to vector<1x256xf32>
    %83 = arith.divf %82, %81 : vector<1x256xf32>
    %84 = vector.broadcast %83 : vector<1x256xf32> to vector<32x256xf32>
    %85 = arith.mulf %79, %84 : vector<32x256xf32>
    %cst_34 = arith.constant dense<0xFF800000> : vector<32xf32>
    %86 = vector.multi_reduction <maximumf>, %73, %cst_34 [1] : vector<32x256xf32> to vector<32xf32>
    %87 = vector.shape_cast %86 : vector<32xf32> to vector<32x1xf32>
    %88 = vector.broadcast %87 : vector<32x1xf32> to vector<32x256xf32>
    %89 = arith.subf %73, %88 : vector<32x256xf32>
    %90 = math.exp %89 : vector<32x256xf32>
    %cst_35 = arith.constant dense<0.000000e+00> : vector<32xf32>
    %91 = vector.multi_reduction <add>, %90, %cst_35 [1] : vector<32x256xf32> to vector<32xf32>
    %92 = vector.shape_cast %91 : vector<32xf32> to vector<32x1xf32>
    %cst_36 = arith.constant dense<0.000000e+00> : vector<32x32xf32>
    %93 = tpu.matmul %90, %74, %cst_36 {dimension_numbers = #tpu.dot_dimension_numbers<[1], [1], [0], [0], [0, 0, 1, 0], [], []>} : vector<32x256xf32>, vector<32x256xf32>, vector<32x32xf32> -> vector<32x32xf32>
    %c64 = arith.constant 64 : index
    %c0_37 = arith.constant 0 : index
    %94 = vector.load %arg5[%c64, %c0_37] : memref<128x4xf32, #tpu.memory_space<vmem>>, vector<32x4xf32>
    %cst_38 = arith.constant dense<0.000000e+00> : vector<32x4xf32>
    %95 = tpu.matmul %93, %94, %cst_38 {dimension_numbers = #tpu.dot_dimension_numbers<[1], [0], [0], [1], [0, 0, 1, 1], [], []>} : vector<32x32xf32>, vector<32x4xf32>, vector<32x4xf32> -> vector<32x4xf32>
    %cst_39 = arith.constant 0.176776692 : f32
    %96 = vector.broadcast %cst_39 : f32 to vector<32x1xf32>
    %97 = arith.divf %96, %92 : vector<32x1xf32>
    %98 = vector.broadcast %97 : vector<32x1xf32> to vector<32x4xf32>
    %99 = arith.mulf %95, %98 : vector<32x4xf32>
    %100 = vector.extract_strided_slice %11 {offsets = [96, 0], sizes = [32, 256], strides = [1, 1]} : vector<128x256xf32> to vector<32x256xf32>
    %101 = vector.extract_strided_slice %13 {offsets = [96, 0], sizes = [32, 256], strides = [1, 1]} : vector<128x256xf32> to vector<32x256xf32>
    %102 = vector.extract_strided_slice %15 {offsets = [96, 0], sizes = [32, 256], strides = [1, 1]} : vector<128x256xf32> to vector<32x256xf32>
    %cst_40 = arith.constant dense<0xFF800000> : vector<256xf32>
    %103 = vector.multi_reduction <maximumf>, %100, %cst_40 [0] : vector<32x256xf32> to vector<256xf32>
    %104 = vector.shape_cast %103 : vector<256xf32> to vector<1x256xf32>
    %105 = vector.broadcast %104 : vector<1x256xf32> to vector<32x256xf32>
    %106 = arith.subf %100, %105 : vector<32x256xf32>
    %107 = math.exp %106 : vector<32x256xf32>
    %cst_41 = arith.constant dense<0.000000e+00> : vector<256xf32>
    %108 = vector.multi_reduction <add>, %107, %cst_41 [0] : vector<32x256xf32> to vector<256xf32>
    %109 = vector.shape_cast %108 : vector<256xf32> to vector<1x256xf32>
    %cst_42 = arith.constant 1.000000e+00 : f32
    %110 = vector.broadcast %cst_42 : f32 to vector<1x256xf32>
    %111 = arith.divf %110, %109 : vector<1x256xf32>
    %112 = vector.broadcast %111 : vector<1x256xf32> to vector<32x256xf32>
    %113 = arith.mulf %107, %112 : vector<32x256xf32>
    %cst_43 = arith.constant dense<0xFF800000> : vector<32xf32>
    %114 = vector.multi_reduction <maximumf>, %101, %cst_43 [1] : vector<32x256xf32> to vector<32xf32>
    %115 = vector.shape_cast %114 : vector<32xf32> to vector<32x1xf32>
    %116 = vector.broadcast %115 : vector<32x1xf32> to vector<32x256xf32>
    %117 = arith.subf %101, %116 : vector<32x256xf32>
    %118 = math.exp %117 : vector<32x256xf32>
    %cst_44 = arith.constant dense<0.000000e+00> : vector<32xf32>
    %119 = vector.multi_reduction <add>, %118, %cst_44 [1] : vector<32x256xf32> to vector<32xf32>
    %120 = vector.shape_cast %119 : vector<32xf32> to vector<32x1xf32>
    %cst_45 = arith.constant dense<0.000000e+00> : vector<32x32xf32>
    %121 = tpu.matmul %118, %102, %cst_45 {dimension_numbers = #tpu.dot_dimension_numbers<[1], [1], [0], [0], [0, 0, 1, 0], [], []>} : vector<32x256xf32>, vector<32x256xf32>, vector<32x32xf32> -> vector<32x32xf32>
    %c96 = arith.constant 96 : index
    %c0_46 = arith.constant 0 : index
    %122 = vector.load %arg5[%c96, %c0_46] : memref<128x4xf32, #tpu.memory_space<vmem>>, vector<32x4xf32>
    %cst_47 = arith.constant dense<0.000000e+00> : vector<32x4xf32>
    %123 = tpu.matmul %121, %122, %cst_47 {dimension_numbers = #tpu.dot_dimension_numbers<[1], [0], [0], [1], [0, 0, 1, 1], [], []>} : vector<32x32xf32>, vector<32x4xf32>, vector<32x4xf32> -> vector<32x4xf32>
    %cst_48 = arith.constant 0.176776692 : f32
    %124 = vector.broadcast %cst_48 : f32 to vector<32x1xf32>
    %125 = arith.divf %124, %120 : vector<32x1xf32>
    %126 = vector.broadcast %125 : vector<32x1xf32> to vector<32x4xf32>
    %127 = arith.mulf %123, %126 : vector<32x4xf32>
    %128 = tpu.concatenate %29, %57, %85, %113 in 0 : vector<32x256xf32>, vector<32x256xf32>, vector<32x256xf32>, vector<32x256xf32> -> vector<128x256xf32>
    %129 = tpu.concatenate %43, %71, %99, %127 in 0 : vector<32x4xf32>, vector<32x4xf32>, vector<32x4xf32>, vector<32x4xf32> -> vector<128x4xf32>
    %cst_49 = arith.constant dense<0.000000e+00> : vector<4x256xf32>
    %130 = tpu.matmul %129, %128, %cst_49 {dimension_numbers = #tpu.dot_dimension_numbers<[0], [0], [1], [1], [0, 1, 1, 1], [], []>} : vector<128x4xf32>, vector<128x256xf32>, vector<4x256xf32> -> vector<4x256xf32>
    %c0_50 = arith.constant 0 : index
    %c0_51 = arith.constant 0 : index
    %131 = vector.load %arg6[%c0_50, %c0_51] : memref<4x1xf32, #tpu.memory_space<vmem>>, vector<4x1xf32>
    %132 = vector.broadcast %131 : vector<4x1xf32> to vector<4x256xf32>
    %133 = arith.addf %130, %132 : vector<4x256xf32>
    %134 = arith.mulf %133, %133 : vector<4x256xf32>
    %cst_52 = arith.constant dense<0.000000e+00> : vector<256xf32>
    %135 = vector.multi_reduction <add>, %134, %cst_52 [0] : vector<4x256xf32> to vector<256xf32>
    %136 = vector.shape_cast %135 : vector<256xf32> to vector<1x256xf32>
    %cst_53 = arith.constant 1.000000e-24 : f32
    %137 = vector.broadcast %cst_53 : f32 to vector<1x256xf32>
    %138 = arith.maximumf %136, %137 : vector<1x256xf32>
    %139 = math.rsqrt %138 : vector<1x256xf32>
    %140 = vector.broadcast %139 : vector<1x256xf32> to vector<4x256xf32>
    %141 = arith.mulf %133, %140 : vector<4x256xf32>
    %c0_54 = arith.constant 0 : index
    %c0_55 = arith.constant 0 : index
    %142 = vector.load %arg7[%c0_54, %c0_55] : memref<4x1xf32, #tpu.memory_space<vmem>>, vector<4x1xf32>
    %143 = vector.broadcast %142 : vector<4x1xf32> to vector<4x256xf32>
    %144 = arith.mulf %141, %143 : vector<4x256xf32>
    %c0_56 = arith.constant 0 : index
    %c0_57 = arith.constant 0 : index
    %c0_58 = arith.constant 0 : index
    %145 = vector.load %arg8[%c0_56, %c0_57, %c0_58] : memref<1x4x256xf32, #tpu.memory_space<vmem>>, vector<1x4x256xf32>
    %146 = vector.shape_cast %145 : vector<1x4x256xf32> to vector<4x256xf32>
    %147 = vector.shape_cast %144 : vector<4x256xf32> to vector<1x4x256xf32>
    tpu.vector_store %arg8[%c0_56, %c0_57, %c0_58], %147 {strides = array<i32>} : memref<1x4x256xf32, #tpu.memory_space<vmem>>, vector<1x4x256xf32>,
    return
  }
  func.func @transform_0(%arg0: i32) -> (i32, i32, i32) {
    %c0_i32 = arith.constant 0 : i32
    %c0_i32_0 = arith.constant 0 : i32
    %c0_i32_1 = arith.constant 0 : i32
    return %arg0, %c0_i32, %c0_i32_0 : i32, i32, i32
  }
  func.func @transform_1(%arg0: i32) -> (i32, i32) {
    %c0_i32 = arith.constant 0 : i32
    %c0_i32_0 = arith.constant 0 : i32
    %c0_i32_1 = arith.constant 0 : i32
    return %c0_i32, %c0_i32_0 : i32, i32
  }
  func.func @transform_2(%arg0: i32) -> (i32, i32) {
    %c0_i32 = arith.constant 0 : i32
    %c0_i32_0 = arith.constant 0 : i32
    %c0_i32_1 = arith.constant 0 : i32
    return %c0_i32, %c0_i32_0 : i32, i32
  }
  func.func @transform_3(%arg0: i32) -> (i32, i32) {
    %c0_i32 = arith.constant 0 : i32
    %c0_i32_0 = arith.constant 0 : i32
    %c0_i32_1 = arith.constant 0 : i32
    return %c0_i32, %c0_i32_0 : i32, i32
  }
  func.func @transform_4(%arg0: i32) -> (i32, i32) {
    %c0_i32 = arith.constant 0 : i32
    %c0_i32_0 = arith.constant 0 : i32
    %c0_i32_1 = arith.constant 0 : i32
    return %c0_i32, %c0_i32_0 : i32, i32
  }
  func.func @transform_5(%arg0: i32) -> (i32, i32) {
    %c0_i32 = arith.constant 0 : i32
    %c0_i32_0 = arith.constant 0 : i32
    %c0_i32_1 = arith.constant 0 : i32
    return %c0_i32, %c0_i32_0 : i32, i32
  }
  func.func @transform_6(%arg0: i32) -> (i32, i32) {
    %c0_i32 = arith.constant 0 : i32
    %c0_i32_0 = arith.constant 0 : i32
    %c0_i32_1 = arith.constant 0 : i32
    return %c0_i32, %c0_i32_0 : i32, i32
  }
  func.func @transform_7(%arg0: i32) -> (i32, i32, i32) {
    %c0_i32 = arith.constant 0 : i32
    %c0_i32_0 = arith.constant 0 : i32
    %c0_i32_1 = arith.constant 0 : i32
    return %arg0, %c0_i32, %c0_i32_0 : i32, i32, i32
  }
}

</mosaic_0001>

<llo_original>
// kernel: tpu_custom_call.1
$region0: #{tpu_custom_call.1}
  #allocation0 [shape = 'u32[]', space=smem, size = 0x4, offset = 0x4, fixed_abs, tag = 'smem constant byte address 0x4 - core index']
  #allocation1 [shape = 'u32[144,128]{1,0:T(1,128)}', space=vmem, size = 0x12000, scoped, tag = 'internal scratch']
  %s0 = inlined_call_operand.vmem [shape: f32[2,4,256], index: 0, kind: input, shape index: {}]
  %s1 = inlined_call_operand.vmem [shape: f32[128,4], index: 1, kind: input, shape index: {}]
  %s2 = inlined_call_operand.vmem [shape: f32[128,4], index: 2, kind: input, shape index: {}]
  %s3 = inlined_call_operand.vmem [shape: f32[128,4], index: 3, kind: input, shape index: {}]
  %s4 = inlined_call_operand.vmem [shape: f32[128,4], index: 4, kind: input, shape index: {}]
  %s5 = inlined_call_operand.vmem [shape: f32[4,1], index: 5, kind: input, shape index: {}]
  %s6 = inlined_call_operand.vmem [shape: f32[4,1], index: 6, kind: input, shape index: {}]
  %s7 = inlined_call_operand.hbm [shape: f32[2,4,256], index: 7, kind: output, shape index: {}]
  %s8 = sld [smem:[#allocation0]]
  $region61: #{tpu_custom_call.1} parent=0
    _
  %s10 = ssub.s32 1, %s8
  %s11 = scalar_select 0, %s10, %s8
  $region1: #{tpu_custom_call.1} parent=0
    #allocation2 [shape = 'u8[8192]{0}', space=vmem, size = 0x2000, scoped, tag = 'output window, operand 0']
    #allocation3 [shape = 's32[2]{0}', space=sflag, size = 0x8, scoped, tag = 'scoped memory for tpu_custom_call.1']
    %12 = vsyncpa [#allocation3], 0
    %s13 = scalar_lea.sflag [#allocation3], 1
    %14 = vsyncpa %s13, 0
    loop: start=0, step=1, limit=4
    $region2: #{tpu_custom_call.1} parent=1 // loop_pre_header
      _
    $region3: #{tpu_custom_call.1} parent=1 // loop_header
      %s16 = sphi 0, %s20
      %p17 = scmp.ge.s32.totalorder %s16, 4
      %s26 = sphi 0, %s28
      %s29 = sphi 0, %s26
      %s30 = sphi 0, %s29
      %s46 = sphi 0, %s30
      %s50 = sphi 0, %s50
      %s52 = sphi 0, %s50
      %s53 = sphi 0, %s52
      %s67 = sphi 0, %s53
      %s71 = sphi 0, %s71
      %s73 = sphi 0, %s71
      %s74 = sphi 0, %s73
      %s88 = sphi 0, %s74
      %s92 = sphi 0, %s92
      %s94 = sphi 0, %s92
      %s95 = sphi 0, %s94
      %s109 = sphi 0, %s95
      %s113 = sphi 0, %s113
      %s115 = sphi 0, %s113
      %s116 = sphi 0, %s115
      %s130 = sphi 0, %s116
      %s134 = sphi 0, %s134
      %s136 = sphi 0, %s134
      %s137 = sphi 0, %s136
      %s151 = sphi 0, %s137
      %s155 = sphi 0, %s155
      %s157 = sphi 0, %s155
      %s158 = sphi 0, %s157
      %s172 = sphi 0, %s158
      %s178 = sphi 0, %s180
      %s181 = sphi 0, %s178
      %s182 = sphi 0, %s181
      %s198 = sphi 0, %s182
    $region4: #{tpu_custom_call.1} parent=1 // loop_header_branch
      %19 = sbr.rel (%p17) target = $region8
    $region5: #{tpu_custom_call.1} parent=1 // loop_body
      %s21 = ssub.s32 %s16, 1
      %s22 = ssub.s32 %s16, 2
      %s23 = sadd.s32 %s16, 1
      %s24 = ssub.s32 %s16, %s23
      %p25 = scmp.eq.s32.totalorder %s24, 0
      %s27 = sadd.s32 %s26, 1
      %s28 = scalar_select %p25, %s26, %s27
      %p31 = pneg %p25
      %p32 = scmp.eq.s32.totalorder %s16, 1
      %p33 = por %p31, %p32
      %p34 = scmp.ne.s32.totalorder %s26, %s29
      %p35 = scmp.eq.s32.totalorder %s16, 0
      %p36 = por %p34, %p35
      %p37 = scmp.ne.s32.totalorder %s26, %s29
      %p38 = scmp.eq.s32.totalorder %s21, 1
      %p39 = por %p37, %p38
      %p40 = scmp.ne.s32.totalorder %s29, %s30
      %p41 = scmp.eq.s32.totalorder %s21, 0
      %p42 = por %p40, %p41
      %p43 = scmp.ne.s32.totalorder %s29, %s30
      %p44 = scmp.eq.s32.totalorder %s22, 1
      %p45 = por %p43, %p44
      %p47 = scmp.ne.s32.totalorder %s30, %s46
      %p48 = scmp.eq.s32.totalorder %s22, 0
      %p49 = por %p47, %p48
      %s51 = sadd.s32 %s50, 1
      %p54 = scmp.eq.s32.totalorder %s16, 1
      %p55 = scmp.ne.s32.totalorder %s50, %s52
      %p56 = scmp.eq.s32.totalorder %s16, 0
      %p57 = por %p55, %p56
      %p58 = scmp.ne.s32.totalorder %s50, %s52
      %p59 = scmp.eq.s32.totalorder %s21, 1
      %p60 = por %p58, %p59
      %p61 = scmp.ne.s32.totalorder %s52, %s53
      %p62 = scmp.eq.s32.totalorder %s21, 0
      %p63 = por %p61, %p62
      %p64 = scmp.ne.s32.totalorder %s52, %s53
      %p65 = scmp.eq.s32.totalorder %s22, 1
      %p66 = por %p64, %p65
      %p68 = scmp.ne.s32.totalorder %s53, %s67
      %p69 = scmp.eq.s32.totalorder %s22, 0
      %p70 = por %p68, %p69
      %s72 = sadd.s32 %s71, 1
      %p75 = scmp.eq.s32.totalorder %s16, 1
      %p76 = scmp.ne.s32.totalorder %s71, %s73
      %p77 = scmp.eq.s32.totalorder %s16, 0
      %p78 = por %p76, %p77
      %p79 = scmp.ne.s32.totalorder %s71, %s73
      %p80 = scmp.eq.s32.totalorder %s21, 1
      %p81 = por %p79, %p80
      %p82 = scmp.ne.s32.totalorder %s73, %s74
      %p83 = scmp.eq.s32.totalorder %s21, 0
      %p84 = por %p82, %p83
      %p85 = scmp.ne.s32.totalorder %s73, %s74
      %p86 = scmp.eq.s32.totalorder %s22, 1
      %p87 = por %p85, %p86
      %p89 = scmp.ne.s32.totalorder %s74, %s88
      %p90 = scmp.eq.s32.totalorder %s22, 0
      %p91 = por %p89, %p90
      %s93 = sadd.s32 %s92, 1
      %p96 = scmp.eq.s32.totalorder %s16, 1
      %p97 = scmp.ne.s32.totalorder %s92, %s94
      %p98 = scmp.eq.s32.totalorder %s16, 0
      %p99 = por %p97, %p98
      %p100 = scmp.ne.s32.totalorder %s92, %s94
      %p101 = scmp.eq.s32.totalorder %s21, 1
      %p102 = por %p100, %p101
      %p103 = scmp.ne.s32.totalorder %s94, %s95
      %p104 = scmp.eq.s32.totalorder %s21, 0
      %p105 = por %p103, %p104
      %p106 = scmp.ne.s32.totalorder %s94, %s95
      %p107 = scmp.eq.s32.totalorder %s22, 1
      %p108 = por %p106, %p107
      %p110 = scmp.ne.s32.totalorder %s95, %s109
      %p111 = scmp.eq.s32.totalorder %s22, 0
      %p112 = por %p110, %p111
      %s114 = sadd.s32 %s113, 1
      %p117 = scmp.eq.s32.totalorder %s16, 1
      %p118 = scmp.ne.s32.totalorder %s113, %s115
      %p119 = scmp.eq.s32.totalorder %s16, 0
      %p120 = por %p118, %p119
      %p121 = scmp.ne.s32.totalorder %s113, %s115
      %p122 = scmp.eq.s32.totalorder %s21, 1
      %p123 = por %p121, %p122
      %p124 = scmp.ne.s32.totalorder %s115, %s116
      %p125 = scmp.eq.s32.totalorder %s21, 0
      %p126 = por %p124, %p125
      %p127 = scmp.ne.s32.totalorder %s115, %s116
      %p128 = scmp.eq.s32.totalorder %s22, 1
      %p129 = por %p127, %p128
      %p131 = scmp.ne.s32.totalorder %s116, %s130
      %p132 = scmp.eq.s32.totalorder %s22, 0
      %p133 = por %p131, %p132
      %s135 = sadd.s32 %s134, 1
      %p138 = scmp.eq.s32.totalorder %s16, 1
      %p139 = scmp.ne.s32.totalorder %s134, %s136
      %p140 = scmp.eq.s32.totalorder %s16, 0
      %p141 = por %p139, %p140
      %p142 = scmp.ne.s32.totalorder %s134, %s136
      %p143 = scmp.eq.s32.totalorder %s21, 1
      %p144 = por %p142, %p143
      %p145 = scmp.ne.s32.totalorder %s136, %s137
      %p146 = scmp.eq.s32.totalorder %s21, 0
      %p147 = por %p145, %p146
      %p148 = scmp.ne.s32.totalorder %s136, %s137
      %p149 = scmp.eq.s32.totalorder %s22, 1
      %p150 = por %p148, %p149
      %p152 = scmp.ne.s32.totalorder %s137, %s151
      %p153 = scmp.eq.s32.totalorder %s22, 0
      %p154 = por %p152, %p153
      %s156 = sadd.s32 %s155, 1
      %p159 = scmp.eq.s32.totalorder %s16, 1
      %p160 = scmp.ne.s32.totalorder %s155, %s157
      %p161 = scmp.eq.s32.totalorder %s16, 0
      %p162 = por %p160, %p161
      %p163 = scmp.ne.s32.totalorder %s155, %s157
      %p164 = scmp.eq.s32.totalorder %s21, 1
      %p165 = por %p163, %p164
      %p166 = scmp.ne.s32.totalorder %s157, %s158
      %p167 = scmp.eq.s32.totalorder %s21, 0
      %p168 = por %p166, %p167
      %p169 = scmp.ne.s32.totalorder %s157, %s158
      %p170 = scmp.eq.s32.totalorder %s22, 1
      %p171 = por %p169, %p170
      %p173 = scmp.ne.s32.totalorder %s158, %s172
      %p174 = scmp.eq.s32.totalorder %s22, 0
      %p175 = por %p173, %p174
      %s176 = ssub.s32 %s16, %s23
      %p177 = scmp.eq.s32.totalorder %s176, 0
      %s179 = sadd.s32 %s178, 1
      %s180 = scalar_select %p177, %s178, %s179
      %p183 = pneg %p177
      %p184 = scmp.eq.s32.totalorder %s16, 1
      %p185 = por %p183, %p184
      %p186 = scmp.ne.s32.totalorder %s178, %s181
      %p187 = scmp.eq.s32.totalorder %s16, 0
      %p188 = por %p186, %p187
      %p189 = scmp.ne.s32.totalorder %s178, %s181
      %p190 = scmp.eq.s32.totalorder %s21, 1
      %p191 = por %p189, %p190
      %p192 = scmp.ne.s32.totalorder %s181, %s182
      %p193 = scmp.eq.s32.totalorder %s21, 0
      %p194 = por %p192, %p193
      %p195 = scmp.ne.s32.totalorder %s181, %s182
      %p196 = scmp.eq.s32.totalorder %s22, 1
      %p197 = por %p195, %p196
      %p199 = scmp.ne.s32.totalorder %s182, %s198
      %p200 = scmp.eq.s32.totalorder %s22, 0
      %p201 = por %p199, %p200
      %p202 = scmp.le.s32.totalorder 1, %s16
      %p203 = scmp.lt.s32.totalorder %s16, 3
      %p204 = pnand %p202, %p203
      %p205 = pneg %p204
      // Predicated region
      $region9: #{tpu_custom_call.1} parent=5 // pred_check
        _
      $region10: #{tpu_custom_call.1} parent=5 // pred_check_branch
        %207 = sbr.rel (%p204) target = $region12
      $region11: #{tpu_custom_call.1} parent=5 // pred_region
        %s208 = ssub.s32 %s16, 1
        // Predicated region
        $region13: #{tpu_custom_call.1} parent=11 // pred_check
          %p209 = pneg %p63
        $region14: #{tpu_custom_call.1} parent=11 // pred_check_branch
          %211 = sbr.rel (%p209) target = $region16
        $region15: #{tpu_custom_call.1} parent=11 // pred_region
          _
        $region16: #{tpu_custom_call.1} parent=11 // pred_fallthru
          _
        // Predicated region
        $region17: #{tpu_custom_call.1} parent=11 // pred_check
          %p212 = pneg %p84
        $region18: #{tpu_custom_call.1} parent=11 // pred_check_branch
          %214 = sbr.rel (%p212) target = $region20
        $region19: #{tpu_custom_call.1} parent=11 // pred_region
          _
        $region20: #{tpu_custom_call.1} parent=11 // pred_fallthru
          _
        // Predicated region
        $region21: #{tpu_custom_call.1} parent=11 // pred_check
          %p215 = pneg %p105
        $region22: #{tpu_custom_call.1} parent=11 // pred_check_branch
          %217 = sbr.rel (%p215) target = $region24
        $region23: #{tpu_custom_call.1} parent=11 // pred_region
          _
        $region24: #{tpu_custom_call.1} parent=11 // pred_fallthru
          _
        // Predicated region
        $region25: #{tpu_custom_call.1} parent=11 // pred_check
          %p218 = pneg %p126
        $region26: #{tpu_custom_call.1} parent=11 // pred_check_branch
          %220 = sbr.rel (%p218) target = $region28
        $region27: #{tpu_custom_call.1} parent=11 // pred_region
          _
        $region28: #{tpu_custom_call.1} parent=11 // pred_fallthru
          _
        // Predicated region
        $region29: #{tpu_custom_call.1} parent=11 // pred_check
          %p221 = pneg %p147
        $region30: #{tpu_custom_call.1} parent=11 // pred_check_branch
          %223 = sbr.rel (%p221) target = $region32
        $region31: #{tpu_custom_call.1} parent=11 // pred_region
          _
        $region32: #{tpu_custom_call.1} parent=11 // pred_fallthru
          _
        // Predicated region
        $region33: #{tpu_custom_call.1} parent=11 // pred_check
          %p224 = pneg %p168
        $region34: #{tpu_custom_call.1} parent=11 // pred_check_branch
          %226 = sbr.rel (%p224) target = $region36
        $region35: #{tpu_custom_call.1} parent=11 // pred_region
          _
        $region36: #{tpu_custom_call.1} parent=11 // pred_fallthru
          _
      $region12: #{tpu_custom_call.1} parent=5 // pred_fallthru
        _
      %p227 = scmp.lt.s32.totalorder %s16, 2
      // Predicated region
      $region37: #{tpu_custom_call.1} parent=5 // pred_check
        %p228 = pneg %p227
      $region38: #{tpu_custom_call.1} parent=5 // pred_check_branch
        %230 = sbr.rel (%p228) target = $region40
      $region39: #{tpu_custom_call.1} parent=5 // pred_region
        // Predicated region
        $region41: #{tpu_custom_call.1} parent=39 // pred_check
          %p231 = pneg %p36
        $region42: #{tpu_custom_call.1} parent=39 // pred_check_branch
          %233 = sbr.rel (%p231) target = $region44
        $region43: #{tpu_custom_call.1} parent=39 // pred_region
          %p234 = scmp.lt.s32.totalorder %s16, 1
          %s235 = scalar_select %p234, %s16, 1
          %s236 = smul.addr %s235, 2
          %s237 = smul.addr %s236, 4
          %s238 = scalar_lea.vmem %s0, %s237
        $region44: #{tpu_custom_call.1} parent=39 // pred_fallthru
          _
      $region40: #{tpu_custom_call.1} parent=5 // pred_fallthru
        _
      %p239 = scmp.le.s32.totalorder 1, %s16
      %p240 = scmp.lt.s32.totalorder %s16, 3
      %p241 = pnand %p239, %p240
      %p242 = pneg %p241
      // Predicated region
      $region45: #{tpu_custom_call.1} parent=5 // pred_check
        _
      $region46: #{tpu_custom_call.1} parent=5 // pred_check_branch
        %244 = sbr.rel (%p241) target = $region48
      $region47: #{tpu_custom_call.1} parent=5 // pred_region
        %s245 = ssub.s32 %s16, 1
        %p246 = scmp.lt.s32.totalorder %s21, 1
        %s247 = scalar_select %p246, %s21, 1
        %s248 = smul.addr %s247, 2
        %s249 = smul.addr %s248, 4
        %s250 = scalar_lea.vmem %s0, %s249
        %p251 = pneg %p42
        %p252 = pneg %p39
        %p253 = pneg %p63
        %p254 = pneg %p60
        %p255 = pneg %p84
        %p256 = pneg %p81
        %p257 = pneg %p105
        %p258 = pneg %p102
        %p259 = pneg %p126
        %p260 = pneg %p123
        %p261 = pneg %p147
        %p262 = pneg %p144
        %p263 = pneg %p168
        %p264 = pneg %p165
        %p265 = pneg %p194
        %p266 = pneg %p191
        %s267 = sand.u32 %s181, 1
        %s268 = scalar_lea.sflag [#allocation3], %s267
        %s269 = sand.u32 %s181, 1
        %s270 = smul.addr %s269, 8
        %s271 = scalar_lea.vmem [#allocation2], %s270
        %p272 = scmp.lt.s32.totalorder %s21, 1
        %s273 = scalar_select %p272, %s21, 1
        %s274 = smul.addr %s273, 2
        %s275 = smul.addr %s274, 4
        %s276 = scalar_lea.vmem %s0, %s275
        %v277 = vld [vmem:[%s276] sm:$0xff]
        %v278 = vmul.f32 %v277, %v277
        %v280 = vcombine.high %v278, %v278
        %vm282 = vcmask 1043456
        %v283 = vsel %vm282, %v278, 0.0
        %v284 = vrot.slane %v283, 4
        %v285 = vadd.f32 %v283, %v284
        %v286 = vrot.slane %v285, 2
        %v287 = vadd.f32 %v285, %v286
        %v288 = vrot.slane %v287, 1
        %v289 = vadd.f32 %v287, %v288
        %v290 = vsel %vm282, %v280, 0.0
        %v291 = vrot.slane %v290, 4
        %v292 = vadd.f32 %v290, %v291
        %v293 = vrot.slane %v292, 2
        %v294 = vadd.f32 %v292, %v293
        %v295 = vrot.slane %v294, 1
        %v296 = vadd.f32 %v294, %v295
        %v297 = vmax.f32 %v289, 1e-24
        %v298 = vmax.f32 %v296, 1e-24
        %v299 = vrsqrt.pop %v297
        %v300 = vrsqrt.pop %v298
        %v303 = vcombine.low %v299, %v300
        %v305 = vmul.f32 %v277, %v303
        %v306 = vld [vmem:[%s1] sm:$0xff]
        %v307 = vld [vmem:[%s1 + $0x8] sm:$0xff]
        %v308 = vld [vmem:[%s1 + $0x10] sm:$0xff]
        %v309 = vld [vmem:[%s1 + $0x18] sm:$0xff]
        %v310 = vld [vmem:[%s1 + $0x20] sm:$0xff]
        %v311 = vld [vmem:[%s1 + $0x28] sm:$0xff]
        %v312 = vld [vmem:[%s1 + $0x30] sm:$0xff]
        %v313 = vld [vmem:[%s1 + $0x38] sm:$0xff]
        %v314 = vld [vmem:[%s1 + $0x40] sm:$0xff]
        %v315 = vld [vmem:[%s1 + $0x48] sm:$0xff]
        %v316 = vld [vmem:[%s1 + $0x50] sm:$0xff]
        %v317 = vld [vmem:[%s1 + $0x58] sm:$0xff]
        %v318 = vld [vmem:[%s1 + $0x60] sm:$0xff]
        %v319 = vld [vmem:[%s1 + $0x68] sm:$0xff]
        %v320 = vld [vmem:[%s1 + $0x70] sm:$0xff]
        %v321 = vld [vmem:[%s1 + $0x78] sm:$0xff]
        %v323 = vcombine.high %v305, %v305
        %vm324 = vcmask 31744
        %v326 = vsel %vm324, %v306, 0
        %v329 = vsel %vm324, %v307, 0
        %v332 = vsel %vm324, %v308, 0
        %v335 = vsel %vm324, %v309, 0
        %v338 = vsel %vm324, %v310, 0
        %v341 = vsel %vm324, %v311, 0
        %v344 = vsel %vm324, %v312, 0
        %v347 = vsel %vm324, %v313, 0
        %v350 = vsel %vm324, %v314, 0
        %v353 = vsel %vm324, %v315, 0
        %v356 = vsel %vm324, %v316, 0
        %v359 = vsel %vm324, %v317, 0
        %v362 = vsel %vm324, %v318, 0
        %v365 = vsel %vm324, %v319, 0
        %v368 = vsel %vm324, %v320, 0
        %v371 = vsel %vm324, %v321, 0
        %v373 = vsel %vm282, %v305, 0
        %v375 = vsel %vm282, %v323, 0
        %377 = vmatprep.subr.mxu0 %v375
        %378 = vmatpush1.msra.mxu0 %v373
        %379 = vmatprep.subr.mxu0 0.0
        %380 = vmatpush1.msra.mxu0 0.0
        %381 = vmatprep.subr.mxu0 0.0
        %382 = vmatpush1.msra.mxu0 0.0
        %383 = vmatprep.subr.mxu0 0.0
        %384 = vmatpush1.msra.mxu0 0.0
        %385 = vmatprep.subr.mxu0 0.0
        %386 = vmatpush1.msra.mxu0 0.0
        %387 = vmatprep.subr.mxu0 0.0
        %388 = vmatpush1.msra.mxu0 0.0
        %389 = vmatprep.subr.mxu0 0.0
        %390 = vmatpush1.msra.mxu0 0.0
        %391 = vmatprep.subr.mxu0 0.0
        %392 = vmatpush1.msra.mxu0 0.0
        %393 = vmatprep.subr.mxu0 0.0
        %394 = vmatpush1.msra.mxu0 0.0
        %395 = vmatprep.subr.mxu0 0.0
        %396 = vmatpush1.msra.mxu0 0.0
        %397 = vmatprep.subr.mxu0 0.0
        %398 = vmatpush1.msra.mxu0 0.0
        %399 = vmatprep.subr.mxu0 0.0
        %400 = vmatpush1.msra.mxu0 0.0
        %401 = vmatprep.subr.mxu0 0.0
        %402 = vmatpush1.msra.mxu0 0.0
        %403 = vmatprep.subr.mxu0 0.0
        %404 = vmatpush1.msra.mxu0 0.0
        %405 = vmatprep.subr.mxu0 0.0
        %406 = vmatpush1.msra.mxu0 0.0
        %407 = vmatprep.subr.mxu0 0.0
        %408 = vmatpush1.msra.mxu0 0.0
        %409 = vmatprep.subr.mxu0 0.0
        %410 = vmatpush1.msra.mxu0 0.0
        %411 = vmatprep.subr.mxu0 0.0
        %412 = vmatpush1.msra.mxu0 0.0
        %413 = vmatprep.subr.mxu0 0.0
        %414 = vmatpush1.msra.mxu0 0.0
        %415 = vmatprep.subr.mxu0 0.0
        %416 = vmatpush1.msra.mxu0 0.0
        %417 = vmatprep.subr.mxu0 0.0
        %418 = vmatpush1.msra.mxu0 0.0
        %419 = vmatprep.subr.mxu0 0.0
        %420 = vmatpush1.msra.mxu0 0.0
        %421 = vmatprep.subr.mxu0 0.0
        %422 = vmatpush1.msra.mxu0 0.0
        %423 = vmatprep.subr.mxu0 0.0
        %424 = vmatpush1.msra.mxu0 0.0
        %425 = vmatprep.subr.mxu0 0.0
        %426 = vmatpush1.msra.mxu0 0.0
        %427 = vmatprep.subr.mxu0 0.0
        %428 = vmatpush1.msra.mxu0 0.0
        %429 = vmatprep.subr.mxu0 0.0
        %430 = vmatpush1.msra.mxu0 0.0
        %431 = vmatprep.subr.mxu0 0.0
        %432 = vmatpush1.msra.mxu0 0.0
        %433 = vmatprep.subr.mxu0 0.0
        %434 = vmatpush1.msra.mxu0 0.0
        %435 = vmatprep.subr.mxu0 0.0
        %436 = vmatpush1.msra.mxu0 0.0
        %437 = vmatprep.subr.mxu0 0.0
        %438 = vmatpush1.msra.mxu0 0.0
        %439 = vmatprep.subr.mxu0 0.0
        %440 = vmatpush1.msra.mxu0 0.0
        %441 = vmatprep.mubr.f32.mxu0 0.0
        %442 = vmatmul.mubr.f32.gmra.mrb[0].mxu0 %v326
        %v443 = vpop.f32.mrb[0].mxu0
        %v444 = vadd.f32 0.0, %v443
        %v445 = vpop.f32.mrb[0].mxu0
        %v446 = vadd.f32 0.0, %v445
        %447 = vmatprep.mubr.f32.mxu0 0.0
        %448 = vmatmul.mubr.f32.gmra.mrb[0].mxu0 %v329
        %v449 = vpop.f32.mrb[0].mxu0
        %v450 = vadd.f32 0.0, %v449
        %v451 = vpop.f32.mrb[0].mxu0
        %v452 = vadd.f32 0.0, %v451
        %453 = vmatprep.mubr.f32.mxu0 0.0
        %454 = vmatmul.mubr.f32.gmra.mrb[0].mxu0 %v332
        %v455 = vpop.f32.mrb[0].mxu0
        %v456 = vadd.f32 0.0, %v455
        %v457 = vpop.f32.mrb[0].mxu0
        %v458 = vadd.f32 0.0, %v457
        %459 = vmatprep.mubr.f32.mxu0 0.0
        %460 = vmatmul.mubr.f32.gmra.mrb[0].mxu0 %v335
        %v461 = vpop.f32.mrb[0].mxu0
        %v462 = vadd.f32 0.0, %v461
        %v463 = vpop.f32.mrb[0].mxu0
        %v464 = vadd.f32 0.0, %v463
        %465 = vmatprep.mubr.f32.mxu0 0.0
        %466 = vmatmul.mubr.f32.gmra.mrb[0].mxu0 %v338
        %v467 = vpop.f32.mrb[0].mxu0
        %v468 = vadd.f32 0.0, %v467
        %v469 = vpop.f32.mrb[0].mxu0
        %v470 = vadd.f32 0.0, %v469
        %471 = vmatprep.mubr.f32.mxu0 0.0
        %472 = vmatmul.mubr.f32.gmra.mrb[0].mxu0 %v341
        %v473 = vpop.f32.mrb[0].mxu0
        %v474 = vadd.f32 0.0, %v473
        %v475 = vpop.f32.mrb[0].mxu0
        %v476 = vadd.f32 0.0, %v475
        %477 = vmatprep.mubr.f32.mxu0 0.0
        %478 = vmatmul.mubr.f32.gmra.mrb[0].mxu0 %v344
        %v479 = vpop.f32.mrb[0].mxu0
        %v480 = vadd.f32 0.0, %v479
        %v481 = vpop.f32.mrb[0].mxu0
        %v482 = vadd.f32 0.0, %v481
        %483 = vmatprep.mubr.f32.mxu0 0.0
        %484 = vmatmul.mubr.f32.gmra.mrb[0].mxu0 %v347
        %v485 = vpop.f32.mrb[0].mxu0
        %v486 = vadd.f32 0.0, %v485
        %v487 = vpop.f32.mrb[0].mxu0
        %v488 = vadd.f32 0.0, %v487
        %489 = vmatprep.mubr.f32.mxu0 0.0
        %490 = vmatmul.mubr.f32.gmra.mrb[0].mxu0 %v350
        %v491 = vpop.f32.mrb[0].mxu0
        %v492 = vadd.f32 0.0, %v491
        %v493 = vpop.f32.mrb[0].mxu0
        %v494 = vadd.f32 0.0, %v493
        %495 = vmatprep.mubr.f32.mxu0 0.0
        %496 = vmatmul.mubr.f32.gmra.mrb[0].mxu0 %v353
        %v497 = vpop.f32.mrb[0].mxu0
        %v498 = vadd.f32 0.0, %v497
        %v499 = vpop.f32.mrb[0].mxu0
        %v500 = vadd.f32 0.0, %v499
        %501 = vmatprep.mubr.f32.mxu0 0.0
        %502 = vmatmul.mubr.f32.gmra.mrb[0].mxu0 %v356
        %v503 = vpop.f32.mrb[0].mxu0
        %v504 = vadd.f32 0.0, %v503
        %v505 = vpop.f32.mrb[0].mxu0
        %v506 = vadd.f32 0.0, %v505
        %507 = vmatprep.mubr.f32.mxu0 0.0
        %508 = vmatmul.mubr.f32.gmra.mrb[0].mxu0 %v359
        %v509 = vpop.f32.mrb[0].mxu0
        %v510 = vadd.f32 0.0, %v509
        %v511 = vpop.f32.mrb[0].mxu0
        %v512 = vadd.f32 0.0, %v511
        %513 = vmatprep.mubr.f32.mxu0 0.0
        %514 = vmatmul.mubr.f32.gmra.mrb[0].mxu0 %v362
        %v515 = vpop.f32.mrb[0].mxu0
        %v516 = vadd.f32 0.0, %v515
        %v517 = vpop.f32.mrb[0].mxu0
        %v518 = vadd.f32 0.0, %v517
        %519 = vmatprep.mubr.f32.mxu0 0.0
        %520 = vmatmul.mubr.f32.gmra.mrb[0].mxu0 %v365
        %v521 = vpop.f32.mrb[0].mxu0
        %v522 = vadd.f32 0.0, %v521
        %v523 = vpop.f32.mrb[0].mxu0
        %v524 = vadd.f32 0.0, %v523
        %525 = vmatprep.mubr.f32.mxu0 0.0
        %526 = vmatmul.mubr.f32.gmra.mrb[0].mxu0 %v368
        %v527 = vpop.f32.mrb[0].mxu0
        %v528 = vadd.f32 0.0, %v527
        %v529 = vpop.f32.mrb[0].mxu0
        %v530 = vadd.f32 0.0, %v529
        %531 = vmatprep.mubr.f32.mxu0 0.0
        %532 = vmatmul.mubr.f32.gmra.mrb[0].mxu0 %v371
        %v533 = vpop.f32.mrb[0].mxu0
        %v534 = vadd.f32 0.0, %v533
        %v535 = vpop.f32.mrb[0].mxu0
        %v536 = vadd.f32 0.0, %v535
        %537 = vdwg.mxu0
        %v538 = vld [vmem:[%s2] sm:$0xff]
        %v539 = vld [vmem:[%s2 + $0x8] sm:$0xff]
        %v540 = vld [vmem:[%s2 + $0x10] sm:$0xff]
        %v541 = vld [vmem:[%s2 + $0x18] sm:$0xff]
        %v542 = vld [vmem:[%s2 + $0x20] sm:$0xff]
        %v543 = vld [vmem:[%s2 + $0x28] sm:$0xff]
        %v544 = vld [vmem:[%s2 + $0x30] sm:$0xff]
        %v545 = vld [vmem:[%s2 + $0x38] sm:$0xff]
        %v546 = vld [vmem:[%s2 + $0x40] sm:$0xff]
        %v547 = vld [vmem:[%s2 + $0x48] sm:$0xff]
        %v548 = vld [vmem:[%s2 + $0x50] sm:$0xff]
        %v549 = vld [vmem:[%s2 + $0x58] sm:$0xff]
        %v550 = vld [vmem:[%s2 + $0x60] sm:$0xff]
        %v551 = vld [vmem:[%s2 + $0x68] sm:$0xff]
        %v552 = vld [vmem:[%s2 + $0x70] sm:$0xff]
        %v553 = vld [vmem:[%s2 + $0x78] sm:$0xff]
        %v555 = vsel %vm324, %v538, 0
        %v558 = vsel %vm324, %v539, 0
        %v561 = vsel %vm324, %v540, 0
        %v564 = vsel %vm324, %v541, 0
        %v567 = vsel %vm324, %v542, 0
        %v570 = vsel %vm324, %v543, 0
        %v573 = vsel %vm324, %v544, 0
        %v576 = vsel %vm324, %v545, 0
        %v579 = vsel %vm324, %v546, 0
        %v582 = vsel %vm324, %v547, 0
        %v585 = vsel %vm324, %v548, 0
        %v588 = vsel %vm324, %v549, 0
        %v591 = vsel %vm324, %v550, 0
        %v594 = vsel %vm324, %v551, 0
        %v597 = vsel %vm324, %v552, 0
        %v600 = vsel %vm324, %v553, 0
        %602 = vmatprep.subr.mxu0 %v375
        %603 = vmatpush1.msra.mxu0 %v373
        %604 = vmatprep.subr.mxu0 0.0
        %605 = vmatpush1.msra.mxu0 0.0
        %606 = vmatprep.subr.mxu0 0.0
        %607 = vmatpush1.msra.mxu0 0.0
        %608 = vmatprep.subr.mxu0 0.0
        %609 = vmatpush1.msra.mxu0 0.0
        %610 = vmatprep.subr.mxu0 0.0
        %611 = vmatpush1.msra.mxu0 0.0
        %612 = vmatprep.subr.mxu0 0.0
        %613 = vmatpush1.msra.mxu0 0.0
        %614 = vmatprep.subr.mxu0 0.0
        %615 = vmatpush1.msra.mxu0 0.0
        %616 = vmatprep.subr.mxu0 0.0
        %617 = vmatpush1.msra.mxu0 0.0
        %618 = vmatprep.subr.mxu0 0.0
        %619 = vmatpush1.msra.mxu0 0.0
        %620 = vmatprep.subr.mxu0 0.0
        %621 = vmatpush1.msra.mxu0 0.0
        %622 = vmatprep.subr.mxu0 0.0
        %623 = vmatpush1.msra.mxu0 0.0
        %624 = vmatprep.subr.mxu0 0.0
        %625 = vmatpush1.msra.mxu0 0.0
        %626 = vmatprep.subr.mxu0 0.0
        %627 = vmatpush1.msra.mxu0 0.0
        %628 = vmatprep.subr.mxu0 0.0
        %629 = vmatpush1.msra.mxu0 0.0
        %630 = vmatprep.subr.mxu0 0.0
        %631 = vmatpush1.msra.mxu0 0.0
        %632 = vmatprep.subr.mxu0 0.0
        %633 = vmatpush1.msra.mxu0 0.0
        %634 = vmatprep.subr.mxu0 0.0
        %635 = vmatpush1.msra.mxu0 0.0
        %636 = vmatprep.subr.mxu0 0.0
        %637 = vmatpush1.msra.mxu0 0.0
        %638 = vmatprep.subr.mxu0 0.0
        %639 = vmatpush1.msra.mxu0 0.0
        %640 = vmatprep.subr.mxu0 0.0
        %641 = vmatpush1.msra.mxu0 0.0
        %642 = vmatprep.subr.mxu0 0.0
        %643 = vmatpush1.msra.mxu0 0.0
        %644 = vmatprep.subr.mxu0 0.0
        %645 = vmatpush1.msra.mxu0 0.0
        %646 = vmatprep.subr.mxu0 0.0
        %647 = vmatpush1.msra.mxu0 0.0
        %648 = vmatprep.subr.mxu0 0.0
        %649 = vmatpush1.msra.mxu0 0.0
        %650 = vmatprep.subr.mxu0 0.0
        %651 = vmatpush1.msra.mxu0 0.0
        %652 = vmatprep.subr.mxu0 0.0
        %653 = vmatpush1.msra.mxu0 0.0
        %654 = vmatprep.subr.mxu0 0.0
        %655 = vmatpush1.msra.mxu0 0.0
        %656 = vmatprep.subr.mxu0 0.0
        %657 = vmatpush1.msra.mxu0 0.0
        %658 = vmatprep.subr.mxu0 0.0
        %659 = vmatpush1.msra.mxu0 0.0
        %660 = vmatprep.subr.mxu0 0.0
        %661 = vmatpush1.msra.mxu0 0.0
        %662 = vmatprep.subr.mxu0 0.0
        %663 = vmatpush1.msra.mxu0 0.0
        %664 = vmatprep.subr.mxu0 0.0
        %665 = vmatpush1.msra.mxu0 0.0
        %666 = vmatprep.mubr.f32.mxu0 0.0
        %667 = vmatmul.mubr.f32.gmra.mrb[0].mxu0 %v555
        %v668 = vpop.f32.mrb[0].mxu0
        %v669 = vadd.f32 0.0, %v668
        %v670 = vpop.f32.mrb[0].mxu0
        %v671 = vadd.f32 0.0, %v670
        %672 = vmatprep.mubr.f32.mxu0 0.0
        %673 = vmatmul.mubr.f32.gmra.mrb[0].mxu0 %v558
        %v674 = vpop.f32.mrb[0].mxu0
        %v675 = vadd.f32 0.0, %v674
        %v676 = vpop.f32.mrb[0].mxu0
        %v677 = vadd.f32 0.0, %v676
        %678 = vmatprep.mubr.f32.mxu0 0.0
        %679 = vmatmul.mubr.f32.gmra.mrb[0].mxu0 %v561
        %v680 = vpop.f32.mrb[0].mxu0
        %v681 = vadd.f32 0.0, %v680
        %v682 = vpop.f32.mrb[0].mxu0
        %v683 = vadd.f32 0.0, %v682
        %684 = vmatprep.mubr.f32.mxu0 0.0
        %685 = vmatmul.mubr.f32.gmra.mrb[0].mxu0 %v564
        %v686 = vpop.f32.mrb[0].mxu0
        %v687 = vadd.f32 0.0, %v686
        %v688 = vpop.f32.mrb[0].mxu0
        %v689 = vadd.f32 0.0, %v688
        %690 = vmatprep.mubr.f32.mxu0 0.0
        %691 = vmatmul.mubr.f32.gmra.mrb[0].mxu0 %v567
        %v692 = vpop.f32.mrb[0].mxu0
        %v693 = vadd.f32 0.0, %v692
        %v694 = vpop.f32.mrb[0].mxu0
        %v695 = vadd.f32 0.0, %v694
        %696 = vmatprep.mubr.f32.mxu0 0.0
        %697 = vmatmul.mubr.f32.gmra.mrb[0].mxu0 %v570
        %v698 = vpop.f32.mrb[0].mxu0
        %v699 = vadd.f32 0.0, %v698
        %v700 = vpop.f32.mrb[0].mxu0
        %v701 = vadd.f32 0.0, %v700
        %702 = vmatprep.mubr.f32.mxu0 0.0
        %703 = vmatmul.mubr.f32.gmra.mrb[0].mxu0 %v573
        %v704 = vpop.f32.mrb[0].mxu0
        %v705 = vadd.f32 0.0, %v704
        %v706 = vpop.f32.mrb[0].mxu0
        %v707 = vadd.f32 0.0, %v706
        %708 = vmatprep.mubr.f32.mxu0 0.0
        %709 = vmatmul.mubr.f32.gmra.mrb[0].mxu0 %v576
        %v710 = vpop.f32.mrb[0].mxu0
        %v711 = vadd.f32 0.0, %v710
        %v712 = vpop.f32.mrb[0].mxu0
        %v713 = vadd.f32 0.0, %v712
        %714 = vmatprep.mubr.f32.mxu0 0.0
        %715 = vmatmul.mubr.f32.gmra.mrb[0].mxu0 %v579
        %v716 = vpop.f32.mrb[0].mxu0
        %v717 = vadd.f32 0.0, %v716
        %v718 = vpop.f32.mrb[0].mxu0
        %v719 = vadd.f32 0.0, %v718
        %720 = vmatprep.mubr.f32.mxu0 0.0
        %721 = vmatmul.mubr.f32.gmra.mrb[0].mxu0 %v582
        %v722 = vpop.f32.mrb[0].mxu0
        %v723 = vadd.f32 0.0, %v722
        %v724 = vpop.f32.mrb[0].mxu0
        %v725 = vadd.f32 0.0, %v724
        %726 = vmatprep.mubr.f32.mxu0 0.0
        %727 = vmatmul.mubr.f32.gmra.mrb[0].mxu0 %v585
        %v728 = vpop.f32.mrb[0].mxu0
        %v729 = vadd.f32 0.0, %v728
        %v730 = vpop.f32.mrb[0].mxu0
        %v731 = vadd.f32 0.0, %v730
        %732 = vmatprep.mubr.f32.mxu0 0.0
        %733 = vmatmul.mubr.f32.gmra.mrb[0].mxu0 %v588
        %v734 = vpop.f32.mrb[0].mxu0
        %v735 = vadd.f32 0.0, %v734
        %v736 = vpop.f32.mrb[0].mxu0
        %v737 = vadd.f32 0.0, %v736
        %738 = vmatprep.mubr.f32.mxu0 0.0
        %739 = vmatmul.mubr.f32.gmra.mrb[0].mxu0 %v591
        %v740 = vpop.f32.mrb[0].mxu0
        %v741 = vadd.f32 0.0, %v740
        %v742 = vpop.f32.mrb[0].mxu0
        %v743 = vadd.f32 0.0, %v742
        %744 = vmatprep.mubr.f32.mxu0 0.0
        %745 = vmatmul.mubr.f32.gmra.mrb[0].mxu0 %v594
        %v746 = vpop.f32.mrb[0].mxu0
        %v747 = vadd.f32 0.0, %v746
        %v748 = vpop.f32.mrb[0].mxu0
        %v749 = vadd.f32 0.0, %v748
        %750 = vmatprep.mubr.f32.mxu0 0.0
        %751 = vmatmul.mubr.f32.gmra.mrb[0].mxu0 %v597
        %v752 = vpop.f32.mrb[0].mxu0
        %v753 = vadd.f32 0.0, %v752
        %v754 = vpop.f32.mrb[0].mxu0
        %v755 = vadd.f32 0.0, %v754
        %756 = vmatprep.mubr.f32.mxu0 0.0
        %757 = vmatmul.mubr.f32.gmra.mrb[0].mxu0 %v600
        %v758 = vpop.f32.mrb[0].mxu0
        %v759 = vadd.f32 0.0, %v758
        %v760 = vpop.f32.mrb[0].mxu0
        %v761 = vadd.f32 0.0, %v760
        %762 = vdwg.mxu0
        %v763 = vld [vmem:[%s3] sm:$0xff]
        %v764 = vld [vmem:[%s3 + $0x8] sm:$0xff]
        %v765 = vld [vmem:[%s3 + $0x10] sm:$0xff]
        %v766 = vld [vmem:[%s3 + $0x18] sm:$0xff]
        %v767 = vld [vmem:[%s3 + $0x20] sm:$0xff]
        %v768 = vld [vmem:[%s3 + $0x28] sm:$0xff]
        %v769 = vld [vmem:[%s3 + $0x30] sm:$0xff]
        %v770 = vld [vmem:[%s3 + $0x38] sm:$0xff]
        %v771 = vld [vmem:[%s3 + $0x40] sm:$0xff]
        %v772 = vld [vmem:[%s3 + $0x48] sm:$0xff]
        %v773 = vld [vmem:[%s3 + $0x50] sm:$0xff]
        %v774 = vld [vmem:[%s3 + $0x58] sm:$0xff]
        %v775 = vld [vmem:[%s3 + $0x60] sm:$0xff]
        %v776 = vld [vmem:[%s3 + $0x68] sm:$0xff]
        %v777 = vld [vmem:[%s3 + $0x70] sm:$0xff]
        %v778 = vld [vmem:[%s3 + $0x78] sm:$0xff]
        %v780 = vsel %vm324, %v763, 0
        %v783 = vsel %vm324, %v764, 0
        %v786 = vsel %vm324, %v765, 0
        %v789 = vsel %vm324, %v766, 0
        %v792 = vsel %vm324, %v767, 0
        %v795 = vsel %vm324, %v768, 0
        %v798 = vsel %vm324, %v769, 0
        %v801 = vsel %vm324, %v770, 0
        %v804 = vsel %vm324, %v771, 0
        %v807 = vsel %vm324, %v772, 0
        %v810 = vsel %vm324, %v773, 0
        %v813 = vsel %vm324, %v774, 0
        %v816 = vsel %vm324, %v775, 0
        %v819 = vsel %vm324, %v776, 0
        %v822 = vsel %vm324, %v777, 0
        %v825 = vsel %vm324, %v778, 0
        %827 = vmatprep.subr.mxu0 %v375
        %828 = vmatpush1.msra.mxu0 %v373
        %829 = vmatprep.subr.mxu0 0.0
        %830 = vmatpush1.msra.mxu0 0.0
        %831 = vmatprep.subr.mxu0 0.0
        %832 = vmatpush1.msra.mxu0 0.0
        %833 = vmatprep.subr.mxu0 0.0
        %834 = vmatpush1.msra.mxu0 0.0
        %835 = vmatprep.subr.mxu0 0.0
        %836 = vmatpush1.msra.mxu0 0.0
        %837 = vmatprep.subr.mxu0 0.0
        %838 = vmatpush1.msra.mxu0 0.0
        %839 = vmatprep.subr.mxu0 0.0
        %840 = vmatpush1.msra.mxu0 0.0
        %841 = vmatprep.subr.mxu0 0.0
        %842 = vmatpush1.msra.mxu0 0.0
        %843 = vmatprep.subr.mxu0 0.0
        %844 = vmatpush1.msra.mxu0 0.0
        %845 = vmatprep.subr.mxu0 0.0
        %846 = vmatpush1.msra.mxu0 0.0
        %847 = vmatprep.subr.mxu0 0.0
        %848 = vmatpush1.msra.mxu0 0.0
        %849 = vmatprep.subr.mxu0 0.0
        %850 = vmatpush1.msra.mxu0 0.0
        %851 = vmatprep.subr.mxu0 0.0
        %852 = vmatpush1.msra.mxu0 0.0
        %853 = vmatprep.subr.mxu0 0.0
        %854 = vmatpush1.msra.mxu0 0.0
        %855 = vmatprep.subr.mxu0 0.0
        %856 = vmatpush1.msra.mxu0 0.0
        %857 = vmatprep.subr.mxu0 0.0
        %858 = vmatpush1.msra.mxu0 0.0
        %859 = vmatprep.subr.mxu0 0.0
        %860 = vmatpush1.msra.mxu0 0.0
        %861 = vmatprep.subr.mxu0 0.0
        %862 = vmatpush1.msra.mxu0 0.0
        %863 = vmatprep.subr.mxu0 0.0
        %864 = vmatpush1.msra.mxu0 0.0
        %865 = vmatprep.subr.mxu0 0.0
        %866 = vmatpush1.msra.mxu0 0.0
        %867 = vmatprep.subr.mxu0 0.0
        %868 = vmatpush1.msra.mxu0 0.0
        %869 = vmatprep.subr.mxu0 0.0
        %870 = vmatpush1.msra.mxu0 0.0
        %871 = vmatprep.subr.mxu0 0.0
        %872 = vmatpush1.msra.mxu0 0.0
        %873 = vmatprep.subr.mxu0 0.0
        %874 = vmatpush1.msra.mxu0 0.0
        %875 = vmatprep.subr.mxu0 0.0
        %876 = vmatpush1.msra.mxu0 0.0
        %877 = vmatprep.subr.mxu0 0.0
        %878 = vmatpush1.msra.mxu0 0.0
        %879 = vmatprep.subr.mxu0 0.0
        %880 = vmatpush1.msra.mxu0 0.0
        %881 = vmatprep.subr.mxu0 0.0
        %882 = vmatpush1.msra.mxu0 0.0
        %883 = vmatprep.subr.mxu0 0.0
        %884 = vmatpush1.msra.mxu0 0.0
        %885 = vmatprep.subr.mxu0 0.0
        %886 = vmatpush1.msra.mxu0 0.0
        %887 = vmatprep.subr.mxu0 0.0
        %888 = vmatpush1.msra.mxu0 0.0
        %889 = vmatprep.subr.mxu0 0.0
        %890 = vmatpush1.msra.mxu0 0.0
        %891 = vmatprep.mubr.f32.mxu0 0.0
        %892 = vmatmul.mubr.f32.gmra.mrb[0].mxu0 %v780
        %v893 = vpop.f32.mrb[0].mxu0
        %v894 = vadd.f32 0.0, %v893
        %v895 = vpop.f32.mrb[0].mxu0
        %v896 = vadd.f32 0.0, %v895
        %897 = vmatprep.mubr.f32.mxu0 0.0
        %898 = vmatmul.mubr.f32.gmra.mrb[0].mxu0 %v783
        %v899 = vpop.f32.mrb[0].mxu0
        %v900 = vadd.f32 0.0, %v899
        %v901 = vpop.f32.mrb[0].mxu0
        %v902 = vadd.f32 0.0, %v901
        %903 = vmatprep.mubr.f32.mxu0 0.0
        %904 = vmatmul.mubr.f32.gmra.mrb[0].mxu0 %v786
        %v905 = vpop.f32.mrb[0].mxu0
        %v906 = vadd.f32 0.0, %v905
        %v907 = vpop.f32.mrb[0].mxu0
        %v908 = vadd.f32 0.0, %v907
        %909 = vmatprep.mubr.f32.mxu0 0.0
        %910 = vmatmul.mubr.f32.gmra.mrb[0].mxu0 %v789
        %v911 = vpop.f32.mrb[0].mxu0
        %v912 = vadd.f32 0.0, %v911
        %v913 = vpop.f32.mrb[0].mxu0
        %v914 = vadd.f32 0.0, %v913
        %915 = vmatprep.mubr.f32.mxu0 0.0
        %916 = vmatmul.mubr.f32.gmra.mrb[0].mxu0 %v792
        %v917 = vpop.f32.mrb[0].mxu0
        %v918 = vadd.f32 0.0, %v917
        %v919 = vpop.f32.mrb[0].mxu0
        %v920 = vadd.f32 0.0, %v919
        %921 = vmatprep.mubr.f32.mxu0 0.0
        %922 = vmatmul.mubr.f32.gmra.mrb[0].mxu0 %v795
        %v923 = vpop.f32.mrb[0].mxu0
        %v924 = vadd.f32 0.0, %v923
        %v925 = vpop.f32.mrb[0].mxu0
        %v926 = vadd.f32 0.0, %v925
        %927 = vmatprep.mubr.f32.mxu0 0.0
        %928 = vmatmul.mubr.f32.gmra.mrb[0].mxu0 %v798
        %v929 = vpop.f32.mrb[0].mxu0
        %v930 = vadd.f32 0.0, %v929
        %v931 = vpop.f32.mrb[0].mxu0
        %v932 = vadd.f32 0.0, %v931
        %933 = vmatprep.mubr.f32.mxu0 0.0
        %934 = vmatmul.mubr.f32.gmra.mrb[0].mxu0 %v801
        %v935 = vpop.f32.mrb[0].mxu0
        %v936 = vadd.f32 0.0, %v935
        %v937 = vpop.f32.mrb[0].mxu0
        %v938 = vadd.f32 0.0, %v937
        %939 = vmatprep.mubr.f32.mxu0 0.0
        %940 = vmatmul.mubr.f32.gmra.mrb[0].mxu0 %v804
        %v941 = vpop.f32.mrb[0].mxu0
        %v942 = vadd.f32 0.0, %v941
        %v943 = vpop.f32.mrb[0].mxu0
        %v944 = vadd.f32 0.0, %v943
        %945 = vmatprep.mubr.f32.mxu0 0.0
        %946 = vmatmul.mubr.f32.gmra.mrb[0].mxu0 %v807
        %v947 = vpop.f32.mrb[0].mxu0
        %v948 = vadd.f32 0.0, %v947
        %v949 = vpop.f32.mrb[0].mxu0
        %v950 = vadd.f32 0.0, %v949
        %951 = vmatprep.mubr.f32.mxu0 0.0
        %952 = vmatmul.mubr.f32.gmra.mrb[0].mxu0 %v810
        %v953 = vpop.f32.mrb[0].mxu0
        %v954 = vadd.f32 0.0, %v953
        %v955 = vpop.f32.mrb[0].mxu0
        %v956 = vadd.f32 0.0, %v955
        %957 = vmatprep.mubr.f32.mxu0 0.0
        %958 = vmatmul.mubr.f32.gmra.mrb[0].mxu0 %v813
        %v959 = vpop.f32.mrb[0].mxu0
        %v960 = vadd.f32 0.0, %v959
        %v961 = vpop.f32.mrb[0].mxu0
        %v962 = vadd.f32 0.0, %v961
        %963 = vmatprep.mubr.f32.mxu0 0.0
        %964 = vmatmul.mubr.f32.gmra.mrb[0].mxu0 %v816
        %v965 = vpop.f32.mrb[0].mxu0
        %v966 = vadd.f32 0.0, %v965
        %v967 = vpop.f32.mrb[0].mxu0
        %v968 = vadd.f32 0.0, %v967
        %969 = vmatprep.mubr.f32.mxu0 0.0
        %970 = vmatmul.mubr.f32.gmra.mrb[0].mxu0 %v819
        %v971 = vpop.f32.mrb[0].mxu0
        %v972 = vadd.f32 0.0, %v971
        %v973 = vpop.f32.mrb[0].mxu0
        %v974 = vadd.f32 0.0, %v973
        %975 = vmatprep.mubr.f32.mxu0 0.0
        %976 = vmatmul.mubr.f32.gmra.mrb[0].mxu0 %v822
        %v977 = vpop.f32.mrb[0].mxu0
        %v978 = vadd.f32 0.0, %v977
        %v979 = vpop.f32.mrb[0].mxu0
        %v980 = vadd.f32 0.0, %v979
        %981 = vmatprep.mubr.f32.mxu0 0.0
        %982 = vmatmul.mubr.f32.gmra.mrb[0].mxu0 %v825
        %v983 = vpop.f32.mrb[0].mxu0
        %v984 = vadd.f32 0.0, %v983
        %v985 = vpop.f32.mrb[0].mxu0
        %v986 = vadd.f32 0.0, %v985
        %987 = vdwg.mxu0
        %v988 = vmax.f32 %v444, %v456
        %v989 = vmax.f32 %v450, %v462
        %v990 = vmax.f32 %v988, %v989
        %v991 = vrot.slane %v990, 4
        %v992 = vmax.f32 %v990, %v991
        %v993 = vrot.slane %v992, 2
        %v994 = vmax.f32 %v992, %v993
        %v995 = vrot.slane %v994, 1
        %v996 = vmax.f32 %v994, %v995
        %v997 = vmax.f32 %v446, %v458
        %v998 = vmax.f32 %v452, %v464
        %v999 = vmax.f32 %v997, %v998
        %v1000 = vrot.slane %v999, 4
        %v1001 = vmax.f32 %v999, %v1000
        %v1002 = vrot.slane %v1001, 2
        %v1003 = vmax.f32 %v1001, %v1002
        %v1004 = vrot.slane %v1003, 1
        %v1005 = vmax.f32 %v1003, %v1004
        %v1006 = vsub.f32 %v444, %v996
        %v1007 = vsub.f32 %v446, %v1005
        %v1008 = vsub.f32 %v450, %v996
        %v1009 = vsub.f32 %v452, %v1005
        %v1010 = vsub.f32 %v456, %v996
        %v1011 = vsub.f32 %v458, %v1005
        %v1012 = vsub.f32 %v462, %v996
        %v1013 = vsub.f32 %v464, %v1005
        %v1014 = vmul.f32 %v1006, 1.442695
        %v1015 = vpow.pop %v1014
        %v1016 = vmul.f32 %v1007, 1.442695
        %v1017 = vpow.pop %v1016
        %v1018 = vmul.f32 %v1008, 1.442695
        %v1019 = vpow.pop %v1018
        %v1020 = vmul.f32 %v1009, 1.442695
        %v1021 = vpow.pop %v1020
        %v1022 = vmul.f32 %v1010, 1.442695
        %v1023 = vpow.pop %v1022
        %v1024 = vmul.f32 %v1011, 1.442695
        %v1025 = vpow.pop %v1024
        %v1026 = vmul.f32 %v1012, 1.442695
        %v1027 = vpow.pop %v1026
        %v1028 = vmul.f32 %v1013, 1.442695
        %v1029 = vpow.pop %v1028
        %v1030 = vadd.f32 %v1015, %v1019
        %v1031 = vadd.f32 %v1030, %v1023
        %v1032 = vadd.f32 %v1031, %v1027
        %v1033 = vrot.slane %v1032, 4
        %v1034 = vadd.f32 %v1032, %v1033
        %v1035 = vrot.slane %v1034, 2
        %v1036 = vadd.f32 %v1034, %v1035
        %v1037 = vrot.slane %v1036, 1
        %v1038 = vadd.f32 %v1036, %v1037
        %v1039 = vadd.f32 %v1017, %v1021
        %v1040 = vadd.f32 %v1039, %v1025
        %v1041 = vadd.f32 %v1040, %v1029
        %v1042 = vrot.slane %v1041, 4
        %v1043 = vadd.f32 %v1041, %v1042
        %v1044 = vrot.slane %v1043, 2
        %v1045 = vadd.f32 %v1043, %v1044
        %v1046 = vrot.slane %v1045, 1
        %v1047 = vadd.f32 %v1045, %v1046
        %v1048 = vrcp.pop %v1038
        %v1049 = vmul.f32 1.0, %v1048
        %v1050 = vrcp.pop %v1047
        %v1051 = vmul.f32 1.0, %v1050
        %v1052 = vmul.f32 %v1015, %v1049
        %v1053 = vmul.f32 %v1017, %v1051
        %v1054 = vmul.f32 %v1019, %v1049
        %v1055 = vmul.f32 %v1021, %v1051
        %v1056 = vmul.f32 %v1023, %v1049
        %v1057 = vmul.f32 %v1025, %v1051
        %v1058 = vmul.f32 %v1027, %v1049
        %v1059 = vmul.f32 %v1029, %v1051
        %v1060 = vmax.f32 %v669, %v671
        %1061 = vmax.xlane.f32.xlu0 %v1060
        %v1062 = vpop.xlane.xlu0 %1061
        %v1063 = vmax.f32 %v675, %v677
        %1064 = vmax.xlane.f32.xlu0 %v1063
        %v1065 = vpop.xlane.xlu0 %1064
        %v1066 = vmax.f32 %v681, %v683
        %1067 = vmax.xlane.f32.xlu0 %v1066
        %v1068 = vpop.xlane.xlu0 %1067
        %v1069 = vmax.f32 %v687, %v689
        %1070 = vmax.xlane.f32.xlu0 %v1069
        %v1071 = vpop.xlane.xlu0 %1070
        %v1072 = vsub.f32 %v669, %v1062
        %v1073 = vsub.f32 %v671, %v1062
        %v1074 = vsub.f32 %v675, %v1065
        %v1075 = vsub.f32 %v677, %v1065
        %v1076 = vsub.f32 %v681, %v1068
        %v1077 = vsub.f32 %v683, %v1068
        %v1078 = vsub.f32 %v687, %v1071
        %v1079 = vsub.f32 %v689, %v1071
        %v1080 = vmul.f32 %v1072, 1.442695
        %v1081 = vpow.pop %v1080
        %v1082 = vmul.f32 %v1073, 1.442695
        %v1083 = vpow.pop %v1082
        %v1084 = vmul.f32 %v1074, 1.442695
        %v1085 = vpow.pop %v1084
        %v1086 = vmul.f32 %v1075, 1.442695
        %v1087 = vpow.pop %v1086
        %v1088 = vmul.f32 %v1076, 1.442695
        %v1089 = vpow.pop %v1088
        %v1090 = vmul.f32 %v1077, 1.442695
        %v1091 = vpow.pop %v1090
        %v1092 = vmul.f32 %v1078, 1.442695
        %v1093 = vpow.pop %v1092
        %v1094 = vmul.f32 %v1079, 1.442695
        %v1095 = vpow.pop %v1094
        %v1096 = vadd.f32 %v1081, %v1083
        %1097 = vadd.xlane.f32.xlu0 %v1096
        %v1098 = vpop.xlane.xlu0 %1097
        %v1099 = vadd.f32 %v1085, %v1087
        %1100 = vadd.xlane.f32.xlu0 %v1099
        %v1101 = vpop.xlane.xlu0 %1100
        %v1102 = vadd.f32 %v1089, %v1091
        %1103 = vadd.xlane.f32.xlu0 %v1102
        %v1104 = vpop.xlane.xlu0 %1103
        %v1105 = vadd.f32 %v1093, %v1095
        %1106 = vadd.xlane.f32.xlu0 %v1105
        %v1107 = vpop.xlane.xlu0 %1106
        %1108 = vmatprep.subr.mxu0 %v896
        %1109 = vmatpush1.xpose.msra.mxu0 %v894
        %1110 = vmatprep.subr.mxu0 %v902
        %1111 = vmatpush1.xpose.msra.mxu0 %v900
        %1112 = vmatprep.subr.mxu0 %v908
        %1113 = vmatpush1.xpose.msra.mxu0 %v906
        %1114 = vmatprep.subr.mxu0 %v914
        %1115 = vmatpush1.xpose.msra.mxu0 %v912
        %1116 = vmatprep.subr.mxu0 0.0
        %1117 = vmatpush1.xpose.msra.mxu0 0.0
        %1118 = vmatprep.subr.mxu0 0.0
        %1119 = vmatpush1.xpose.msra.mxu0 0.0
        %1120 = vmatprep.subr.mxu0 0.0
        %1121 = vmatpush1.xpose.msra.mxu0 0.0
        %1122 = vmatprep.subr.mxu0 0.0
        %1123 = vmatpush1.xpose.msra.mxu0 0.0
        %1124 = vmatprep.subr.mxu0 0.0
        %1125 = vmatpush1.xpose.msra.mxu0 0.0
        %1126 = vmatprep.subr.mxu0 0.0
        %1127 = vmatpush1.xpose.msra.mxu0 0.0
        %1128 = vmatprep.subr.mxu0 0.0
        %1129 = vmatpush1.xpose.msra.mxu0 0.0
        %1130 = vmatprep.subr.mxu0 0.0
        %1131 = vmatpush1.xpose.msra.mxu0 0.0
        %1132 = vmatprep.subr.mxu0 0.0
        %1133 = vmatpush1.xpose.msra.mxu0 0.0
        %1134 = vmatprep.subr.mxu0 0.0
        %1135 = vmatpush1.xpose.msra.mxu0 0.0
        %1136 = vmatprep.subr.mxu0 0.0
        %1137 = vmatpush1.xpose.msra.mxu0 0.0
        %1138 = vmatprep.subr.mxu0 0.0
        %1139 = vmatpush1.xpose.msra.mxu0 0.0
        %1140 = vmatprep.subr.mxu0 0.0
        %1141 = vmatpush1.xpose.msra.mxu0 0.0
        %1142 = vmatprep.subr.mxu0 0.0
        %1143 = vmatpush1.xpose.msra.mxu0 0.0
        %1144 = vmatprep.subr.mxu0 0.0
        %1145 = vmatpush1.xpose.msra.mxu0 0.0
        %1146 = vmatprep.subr.mxu0 0.0
        %1147 = vmatpush1.xpose.msra.mxu0 0.0
        %1148 = vmatprep.subr.mxu0 0.0
        %1149 = vmatpush1.xpose.msra.mxu0 0.0
        %1150 = vmatprep.subr.mxu0 0.0
        %1151 = vmatpush1.xpose.msra.mxu0 0.0
        %1152 = vmatprep.subr.mxu0 0.0
        %1153 = vmatpush1.xpose.msra.mxu0 0.0
        %1154 = vmatprep.subr.mxu0 0.0
        %1155 = vmatpush1.xpose.msra.mxu0 0.0
        %1156 = vmatprep.subr.mxu0 0.0
        %1157 = vmatpush1.xpose.msra.mxu0 0.0
        %1158 = vmatprep.subr.mxu0 0.0
        %1159 = vmatpush1.xpose.msra.mxu0 0.0
        %1160 = vmatprep.subr.mxu0 0.0
        %1161 = vmatpush1.xpose.msra.mxu0 0.0
        %1162 = vmatprep.subr.mxu0 0.0
        %1163 = vmatpush1.xpose.msra.mxu0 0.0
        %1164 = vmatprep.subr.mxu0 0.0
        %1165 = vmatpush1.xpose.msra.mxu0 0.0
        %1166 = vmatprep.subr.mxu0 0.0
        %1167 = vmatpush1.xpose.msra.mxu0 0.0
        %1168 = vmatprep.subr.mxu0 0.0
        %1169 = vmatpush1.xpose.msra.mxu0 0.0
        %1170 = vmatprep.subr.mxu0 0.0
        %1171 = vmatpush1.xpose.msra.mxu0 0.0
        %1172 = vmatprep.mubr.f32.mxu0 %v1083
        %1173 = vmatmul.mubr.f32.gmra.mrb[0].mxu0 %v1081
        %v1174 = vpop.f32.mrb[0].mxu0
        %v1175 = vadd.f32 0.0, %v1174
        %v1176 = vpop.f32.mrb[0].mxu0
        %1177 = vmatprep.mubr.f32.mxu0 %v1087
        %1178 = vmatmul.mubr.f32.gmra.mrb[0].mxu0 %v1085
        %v1179 = vpop.f32.mrb[0].mxu0
        %v1180 = vadd.f32 0.0, %v1179
        %v1181 = vpop.f32.mrb[0].mxu0
        %1182 = vmatprep.mubr.f32.mxu0 %v1091
        %1183 = vmatmul.mubr.f32.gmra.mrb[0].mxu0 %v1089
        %v1184 = vpop.f32.mrb[0].mxu0
        %v1185 = vadd.f32 0.0, %v1184
        %v1186 = vpop.f32.mrb[0].mxu0
        %1187 = vmatprep.mubr.f32.mxu0 %v1095
        %1188 = vmatmul.mubr.f32.gmra.mrb[0].mxu0 %v1093
        %v1189 = vpop.f32.mrb[0].mxu0
        %v1190 = vadd.f32 0.0, %v1189
        %v1191 = vpop.f32.mrb[0].mxu0
        %1192 = vdwg.mxu0
        %v1193 = vld [vmem:[%s4] sm:$0xff]
        %v1194 = vld [vmem:[%s4 + $0x8] sm:$0xff]
        %v1195 = vld [vmem:[%s4 + $0x10] sm:$0xff]
        %v1196 = vld [vmem:[%s4 + $0x18] sm:$0xff]
        %vm1197 = vcmask 261120
        %v1199 = vsel %vm1197, %v1175, 0
        %v1202 = vsel %vm1197, %v1180, 0
        %v1205 = vsel %vm1197, %v1185, 0
        %v1208 = vsel %vm1197, %v1190, 0
        %1210 = vmatprep.subr.mxu0 0.0
        %1211 = vmatpush1.msra.mxu0 %v1193
        %1212 = vmatprep.subr.mxu0 0.0
        %1213 = vmatpush1.msra.mxu0 %v1194
        %1214 = vmatprep.subr.mxu0 0.0
        %1215 = vmatpush1.msra.mxu0 %v1195
        %1216 = vmatprep.subr.mxu0 0.0
        %1217 = vmatpush1.msra.mxu0 %v1196
        %1218 = vmatprep.subr.mxu0 0.0
        %1219 = vmatpush1.msra.mxu0 0.0
        %1220 = vmatprep.subr.mxu0 0.0
        %1221 = vmatpush1.msra.mxu0 0.0
        %1222 = vmatprep.subr.mxu0 0.0
        %1223 = vmatpush1.msra.mxu0 0.0
        %1224 = vmatprep.subr.mxu0 0.0
        %1225 = vmatpush1.msra.mxu0 0.0
        %1226 = vmatprep.subr.mxu0 0.0
        %1227 = vmatpush1.msra.mxu0 0.0
        %1228 = vmatprep.subr.mxu0 0.0
        %1229 = vmatpush1.msra.mxu0 0.0
        %1230 = vmatprep.subr.mxu0 0.0
        %1231 = vmatpush1.msra.mxu0 0.0
        %1232 = vmatprep.subr.mxu0 0.0
        %1233 = vmatpush1.msra.mxu0 0.0
        %1234 = vmatprep.subr.mxu0 0.0
        %1235 = vmatpush1.msra.mxu0 0.0
        %1236 = vmatprep.subr.mxu0 0.0
        %1237 = vmatpush1.msra.mxu0 0.0
        %1238 = vmatprep.subr.mxu0 0.0
        %1239 = vmatpush1.msra.mxu0 0.0
        %1240 = vmatprep.subr.mxu0 0.0
        %1241 = vmatpush1.msra.mxu0 0.0
        %1242 = vmatprep.subr.mxu0 0.0
        %1243 = vmatpush1.msra.mxu0 0.0
        %1244 = vmatprep.subr.mxu0 0.0
        %1245 = vmatpush1.msra.mxu0 0.0
        %1246 = vmatprep.subr.mxu0 0.0
        %1247 = vmatpush1.msra.mxu0 0.0
        %1248 = vmatprep.subr.mxu0 0.0
        %1249 = vmatpush1.msra.mxu0 0.0
        %1250 = vmatprep.subr.mxu0 0.0
        %1251 = vmatpush1.msra.mxu0 0.0
        %1252 = vmatprep.subr.mxu0 0.0
        %1253 = vmatpush1.msra.mxu0 0.0
        %1254 = vmatprep.subr.mxu0 0.0
        %1255 = vmatpush1.msra.mxu0 0.0
        %1256 = vmatprep.subr.mxu0 0.0
        %1257 = vmatpush1.msra.mxu0 0.0
        %1258 = vmatprep.subr.mxu0 0.0
        %1259 = vmatpush1.msra.mxu0 0.0
        %1260 = vmatprep.subr.mxu0 0.0
        %1261 = vmatpush1.msra.mxu0 0.0
        %1262 = vmatprep.subr.mxu0 0.0
        %1263 = vmatpush1.msra.mxu0 0.0
        %1264 = vmatprep.subr.mxu0 0.0
        %1265 = vmatpush1.msra.mxu0 0.0
        %1266 = vmatprep.subr.mxu0 0.0
        %1267 = vmatpush1.msra.mxu0 0.0
        %1268 = vmatprep.subr.mxu0 0.0
        %1269 = vmatpush1.msra.mxu0 0.0
        %1270 = vmatprep.subr.mxu0 0.0
        %1271 = vmatpush1.msra.mxu0 0.0
        %1272 = vmatprep.subr.mxu0 0.0
        %1273 = vmatpush1.msra.mxu0 0.0
        %1274 = vmatprep.mubr.f32.mxu0 0.0
        %1275 = vmatmul.mubr.f32.gmra.mrb[0].mxu0 %v1199
        %v1276 = vpop.f32.mrb[0].mxu0
        %v1277 = vadd.f32 0.0, %v1276
        %v1278 = vpop.f32.mrb[0].mxu0
        %1279 = vmatprep.mubr.f32.mxu0 0.0
        %1280 = vmatmul.mubr.f32.gmra.mrb[0].mxu0 %v1202
        %v1281 = vpop.f32.mrb[0].mxu0
        %v1282 = vadd.f32 0.0, %v1281
        %v1283 = vpop.f32.mrb[0].mxu0
        %1284 = vmatprep.mubr.f32.mxu0 0.0
        %1285 = vmatmul.mubr.f32.gmra.mrb[0].mxu0 %v1205
        %v1286 = vpop.f32.mrb[0].mxu0
        %v1287 = vadd.f32 0.0, %v1286
        %v1288 = vpop.f32.mrb[0].mxu0
        %1289 = vmatprep.mubr.f32.mxu0 0.0
        %1290 = vmatmul.mubr.f32.gmra.mrb[0].mxu0 %v1208
        %v1291 = vpop.f32.mrb[0].mxu0
        %v1292 = vadd.f32 0.0, %v1291
        %v1293 = vpop.f32.mrb[0].mxu0
        %1294 = vdwg.mxu0
        %v1295 = vrcp.pop %v1098
        %v1296 = vmul.f32 0.17677669, %v1295
        %v1297 = vrcp.pop %v1101
        %v1298 = vmul.f32 0.17677669, %v1297
        %v1299 = vrcp.pop %v1104
        %v1300 = vmul.f32 0.17677669, %v1299
        %v1301 = vrcp.pop %v1107
        %v1302 = vmul.f32 0.17677669, %v1301
        %v1303 = vmul.f32 %v1277, %v1296
        %v1304 = vmul.f32 %v1282, %v1298
        %v1305 = vmul.f32 %v1287, %v1300
        %v1306 = vmul.f32 %v1292, %v1302
        %v1307 = vmax.f32 %v468, %v480
        %v1308 = vmax.f32 %v474, %v486
        %v1309 = vmax.f32 %v1307, %v1308
        %v1310 = vrot.slane %v1309, 4
        %v1311 = vmax.f32 %v1309, %v1310
        %v1312 = vrot.slane %v1311, 2
        %v1313 = vmax.f32 %v1311, %v1312
        %v1314 = vrot.slane %v1313, 1
        %v1315 = vmax.f32 %v1313, %v1314
        %v1316 = vmax.f32 %v470, %v482
        %v1317 = vmax.f32 %v476, %v488
        %v1318 = vmax.f32 %v1316, %v1317
        %v1319 = vrot.slane %v1318, 4
        %v1320 = vmax.f32 %v1318, %v1319
        %v1321 = vrot.slane %v1320, 2
        %v1322 = vmax.f32 %v1320, %v1321
        %v1323 = vrot.slane %v1322, 1
        %v1324 = vmax.f32 %v1322, %v1323
        %v1325 = vsub.f32 %v468, %v1315
        %v1326 = vsub.f32 %v470, %v1324
        %v1327 = vsub.f32 %v474, %v1315
        %v1328 = vsub.f32 %v476, %v1324
        %v1329 = vsub.f32 %v480, %v1315
        %v1330 = vsub.f32 %v482, %v1324
        %v1331 = vsub.f32 %v486, %v1315
        %v1332 = vsub.f32 %v488, %v1324
        %v1333 = vmul.f32 %v1325, 1.442695
        %v1334 = vpow.pop %v1333
        %v1335 = vmul.f32 %v1326, 1.442695
        %v1336 = vpow.pop %v1335
        %v1337 = vmul.f32 %v1327, 1.442695
        %v1338 = vpow.pop %v1337
        %v1339 = vmul.f32 %v1328, 1.442695
        %v1340 = vpow.pop %v1339
        %v1341 = vmul.f32 %v1329, 1.442695
        %v1342 = vpow.pop %v1341
        %v1343 = vmul.f32 %v1330, 1.442695
        %v1344 = vpow.pop %v1343
        %v1345 = vmul.f32 %v1331, 1.442695
        %v1346 = vpow.pop %v1345
        %v1347 = vmul.f32 %v1332, 1.442695
        %v1348 = vpow.pop %v1347
        %v1349 = vadd.f32 %v1334, %v1338
        %v1350 = vadd.f32 %v1349, %v1342
        %v1351 = vadd.f32 %v1350, %v1346
        %v1352 = vrot.slane %v1351, 4
        %v1353 = vadd.f32 %v1351, %v1352
        %v1354 = vrot.slane %v1353, 2
        %v1355 = vadd.f32 %v1353, %v1354
        %v1356 = vrot.slane %v1355, 1
        %v1357 = vadd.f32 %v1355, %v1356
        %v1358 = vadd.f32 %v1336, %v1340
        %v1359 = vadd.f32 %v1358, %v1344
        %v1360 = vadd.f32 %v1359, %v1348
        %v1361 = vrot.slane %v1360, 4
        %v1362 = vadd.f32 %v1360, %v1361
        %v1363 = vrot.slane %v1362, 2
        %v1364 = vadd.f32 %v1362, %v1363
        %v1365 = vrot.slane %v1364, 1
        %v1366 = vadd.f32 %v1364, %v1365
        %v1367 = vrcp.pop %v1357
        %v1368 = vmul.f32 1.0, %v1367
        %v1369 = vrcp.pop %v1366
        %v1370 = vmul.f32 1.0, %v1369
        %v1371 = vmul.f32 %v1334, %v1368
        %v1372 = vmul.f32 %v1336, %v1370
        %v1373 = vmul.f32 %v1338, %v1368
        %v1374 = vmul.f32 %v1340, %v1370
        %v1375 = vmul.f32 %v1342, %v1368
        %v1376 = vmul.f32 %v1344, %v1370
        %v1377 = vmul.f32 %v1346, %v1368
        %v1378 = vmul.f32 %v1348, %v1370
        %v1379 = vmax.f32 %v693, %v695
        %1380 = vmax.xlane.f32.xlu0 %v1379
        %v1381 = vpop.xlane.xlu0 %1380
        %v1382 = vmax.f32 %v699, %v701
        %1383 = vmax.xlane.f32.xlu0 %v1382
        %v1384 = vpop.xlane.xlu0 %1383
        %v1385 = vmax.f32 %v705, %v707
        %1386 = vmax.xlane.f32.xlu0 %v1385
        %v1387 = vpop.xlane.xlu0 %1386
        %v1388 = vmax.f32 %v711, %v713
        %1389 = vmax.xlane.f32.xlu0 %v1388
        %v1390 = vpop.xlane.xlu0 %1389
        %v1391 = vsub.f32 %v693, %v1381
        %v1392 = vsub.f32 %v695, %v1381
        %v1393 = vsub.f32 %v699, %v1384
        %v1394 = vsub.f32 %v701, %v1384
        %v1395 = vsub.f32 %v705, %v1387
        %v1396 = vsub.f32 %v707, %v1387
        %v1397 = vsub.f32 %v711, %v1390
        %v1398 = vsub.f32 %v713, %v1390
        %v1399 = vmul.f32 %v1391, 1.442695
        %v1400 = vpow.pop %v1399
        %v1401 = vmul.f32 %v1392, 1.442695
        %v1402 = vpow.pop %v1401
        %v1403 = vmul.f32 %v1393, 1.442695
        %v1404 = vpow.pop %v1403
        %v1405 = vmul.f32 %v1394, 1.442695
        %v1406 = vpow.pop %v1405
        %v1407 = vmul.f32 %v1395, 1.442695
        %v1408 = vpow.pop %v1407
        %v1409 = vmul.f32 %v1396, 1.442695
        %v1410 = vpow.pop %v1409
        %v1411 = vmul.f32 %v1397, 1.442695
        %v1412 = vpow.pop %v1411
        %v1413 = vmul.f32 %v1398, 1.442695
        %v1414 = vpow.pop %v1413
        %v1415 = vadd.f32 %v1400, %v1402
        %1416 = vadd.xlane.f32.xlu0 %v1415
        %v1417 = vpop.xlane.xlu0 %1416
        %v1418 = vadd.f32 %v1404, %v1406
        %1419 = vadd.xlane.f32.xlu0 %v1418
        %v1420 = vpop.xlane.xlu0 %1419
        %v1421 = vadd.f32 %v1408, %v1410
        %1422 = vadd.xlane.f32.xlu0 %v1421
        %v1423 = vpop.xlane.xlu0 %1422
        %v1424 = vadd.f32 %v1412, %v1414
        %1425 = vadd.xlane.f32.xlu0 %v1424
        %v1426 = vpop.xlane.xlu0 %1425
        %1427 = vmatprep.subr.mxu0 %v920
        %1428 = vmatpush1.xpose.msra.mxu0 %v918
        %1429 = vmatprep.subr.mxu0 %v926
        %1430 = vmatpush1.xpose.msra.mxu0 %v924
        %1431 = vmatprep.subr.mxu0 %v932
        %1432 = vmatpush1.xpose.msra.mxu0 %v930
        %1433 = vmatprep.subr.mxu0 %v938
        %1434 = vmatpush1.xpose.msra.mxu0 %v936
        %1435 = vmatprep.subr.mxu0 0.0
        %1436 = vmatpush1.xpose.msra.mxu0 0.0
        %1437 = vmatprep.subr.mxu0 0.0
        %1438 = vmatpush1.xpose.msra.mxu0 0.0
        %1439 = vmatprep.subr.mxu0 0.0
        %1440 = vmatpush1.xpose.msra.mxu0 0.0
        %1441 = vmatprep.subr.mxu0 0.0
        %1442 = vmatpush1.xpose.msra.mxu0 0.0
        %1443 = vmatprep.subr.mxu0 0.0
        %1444 = vmatpush1.xpose.msra.mxu0 0.0
        %1445 = vmatprep.subr.mxu0 0.0
        %1446 = vmatpush1.xpose.msra.mxu0 0.0
        %1447 = vmatprep.subr.mxu0 0.0
        %1448 = vmatpush1.xpose.msra.mxu0 0.0
        %1449 = vmatprep.subr.mxu0 0.0
        %1450 = vmatpush1.xpose.msra.mxu0 0.0
        %1451 = vmatprep.subr.mxu0 0.0
        %1452 = vmatpush1.xpose.msra.mxu0 0.0
        %1453 = vmatprep.subr.mxu0 0.0
        %1454 = vmatpush1.xpose.msra.mxu0 0.0
        %1455 = vmatprep.subr.mxu0 0.0
        %1456 = vmatpush1.xpose.msra.mxu0 0.0
        %1457 = vmatprep.subr.mxu0 0.0
        %1458 = vmatpush1.xpose.msra.mxu0 0.0
        %1459 = vmatprep.subr.mxu0 0.0
        %1460 = vmatpush1.xpose.msra.mxu0 0.0
        %1461 = vmatprep.subr.mxu0 0.0
        %1462 = vmatpush1.xpose.msra.mxu0 0.0
        %1463 = vmatprep.subr.mxu0 0.0
        %1464 = vmatpush1.xpose.msra.mxu0 0.0
        %1465 = vmatprep.subr.mxu0 0.0
        %1466 = vmatpush1.xpose.msra.mxu0 0.0
        %1467 = vmatprep.subr.mxu0 0.0
        %1468 = vmatpush1.xpose.msra.mxu0 0.0
        %1469 = vmatprep.subr.mxu0 0.0
        %1470 = vmatpush1.xpose.msra.mxu0 0.0
        %1471 = vmatprep.subr.mxu0 0.0
        %1472 = vmatpush1.xpose.msra.mxu0 0.0
        %1473 = vmatprep.subr.mxu0 0.0
        %1474 = vmatpush1.xpose.msra.mxu0 0.0
        %1475 = vmatprep.subr.mxu0 0.0
        %1476 = vmatpush1.xpose.msra.mxu0 0.0
        %1477 = vmatprep.subr.mxu0 0.0
        %1478 = vmatpush1.xpose.msra.mxu0 0.0
        %1479 = vmatprep.subr.mxu0 0.0
        %1480 = vmatpush1.xpose.msra.mxu0 0.0
        %1481 = vmatprep.subr.mxu0 0.0
        %1482 = vmatpush1.xpose.msra.mxu0 0.0
        %1483 = vmatprep.subr.mxu0 0.0
        %1484 = vmatpush1.xpose.msra.mxu0 0.0
        %1485 = vmatprep.subr.mxu0 0.0
        %1486 = vmatpush1.xpose.msra.mxu0 0.0
        %1487 = vmatprep.subr.mxu0 0.0
        %1488 = vmatpush1.xpose.msra.mxu0 0.0
        %1489 = vmatprep.subr.mxu0 0.0
        %1490 = vmatpush1.xpose.msra.mxu0 0.0
        %1491 = vmatprep.mubr.f32.mxu0 %v1402
        %1492 = vmatmul.mubr.f32.gmra.mrb[0].mxu0 %v1400
        %v1493 = vpop.f32.mrb[0].mxu0
        %v1494 = vadd.f32 0.0, %v1493
        %v1495 = vpop.f32.mrb[0].mxu0
        %1496 = vmatprep.mubr.f32.mxu0 %v1406
        %1497 = vmatmul.mubr.f32.gmra.mrb[0].mxu0 %v1404
        %v1498 = vpop.f32.mrb[0].mxu0
        %v1499 = vadd.f32 0.0, %v1498
        %v1500 = vpop.f32.mrb[0].mxu0
        %1501 = vmatprep.mubr.f32.mxu0 %v1410
        %1502 = vmatmul.mubr.f32.gmra.mrb[0].mxu0 %v1408
        %v1503 = vpop.f32.mrb[0].mxu0
        %v1504 = vadd.f32 0.0, %v1503
        %v1505 = vpop.f32.mrb[0].mxu0
        %1506 = vmatprep.mubr.f32.mxu0 %v1414
        %1507 = vmatmul.mubr.f32.gmra.mrb[0].mxu0 %v1412
        %v1508 = vpop.f32.mrb[0].mxu0
        %v1509 = vadd.f32 0.0, %v1508
        %v1510 = vpop.f32.mrb[0].mxu0
        %1511 = vdwg.mxu0
        %v1512 = vld [vmem:[%s4 + $0x20] sm:$0xff]
        %v1513 = vld [vmem:[%s4 + $0x28] sm:$0xff]
        %v1514 = vld [vmem:[%s4 + $0x30] sm:$0xff]
        %v1515 = vld [vmem:[%s4 + $0x38] sm:$0xff]
        %v1517 = vsel %vm1197, %v1494, 0
        %v1520 = vsel %vm1197, %v1499, 0
        %v1523 = vsel %vm1197, %v1504, 0
        %v1526 = vsel %vm1197, %v1509, 0
        %1528 = vmatprep.subr.mxu0 0.0
        %1529 = vmatpush1.msra.mxu0 %v1512
        %1530 = vmatprep.subr.mxu0 0.0
        %1531 = vmatpush1.msra.mxu0 %v1513
        %1532 = vmatprep.subr.mxu0 0.0
        %1533 = vmatpush1.msra.mxu0 %v1514
        %1534 = vmatprep.subr.mxu0 0.0
        %1535 = vmatpush1.msra.mxu0 %v1515
        %1536 = vmatprep.subr.mxu0 0.0
        %1537 = vmatpush1.msra.mxu0 0.0
        %1538 = vmatprep.subr.mxu0 0.0
        %1539 = vmatpush1.msra.mxu0 0.0
        %1540 = vmatprep.subr.mxu0 0.0
        %1541 = vmatpush1.msra.mxu0 0.0
        %1542 = vmatprep.subr.mxu0 0.0
        %1543 = vmatpush1.msra.mxu0 0.0
        %1544 = vmatprep.subr.mxu0 0.0
        %1545 = vmatpush1.msra.mxu0 0.0
        %1546 = vmatprep.subr.mxu0 0.0
        %1547 = vmatpush1.msra.mxu0 0.0
        %1548 = vmatprep.subr.mxu0 0.0
        %1549 = vmatpush1.msra.mxu0 0.0
        %1550 = vmatprep.subr.mxu0 0.0
        %1551 = vmatpush1.msra.mxu0 0.0
        %1552 = vmatprep.subr.mxu0 0.0
        %1553 = vmatpush1.msra.mxu0 0.0
        %1554 = vmatprep.subr.mxu0 0.0
        %1555 = vmatpush1.msra.mxu0 0.0
        %1556 = vmatprep.subr.mxu0 0.0
        %1557 = vmatpush1.msra.mxu0 0.0
        %1558 = vmatprep.subr.mxu0 0.0
        %1559 = vmatpush1.msra.mxu0 0.0
        %1560 = vmatprep.subr.mxu0 0.0
        %1561 = vmatpush1.msra.mxu0 0.0
        %1562 = vmatprep.subr.mxu0 0.0
        %1563 = vmatpush1.msra.mxu0 0.0
        %1564 = vmatprep.subr.mxu0 0.0
        %1565 = vmatpush1.msra.mxu0 0.0
        %1566 = vmatprep.subr.mxu0 0.0
        %1567 = vmatpush1.msra.mxu0 0.0
        %1568 = vmatprep.subr.mxu0 0.0
        %1569 = vmatpush1.msra.mxu0 0.0
        %1570 = vmatprep.subr.mxu0 0.0
        %1571 = vmatpush1.msra.mxu0 0.0
        %1572 = vmatprep.subr.mxu0 0.0
        %1573 = vmatpush1.msra.mxu0 0.0
        %1574 = vmatprep.subr.mxu0 0.0
        %1575 = vmatpush1.msra.mxu0 0.0
        %1576 = vmatprep.subr.mxu0 0.0
        %1577 = vmatpush1.msra.mxu0 0.0
        %1578 = vmatprep.subr.mxu0 0.0
        %1579 = vmatpush1.msra.mxu0 0.0
        %1580 = vmatprep.subr.mxu0 0.0
        %1581 = vmatpush1.msra.mxu0 0.0
        %1582 = vmatprep.subr.mxu0 0.0
        %1583 = vmatpush1.msra.mxu0 0.0
        %1584 = vmatprep.subr.mxu0 0.0
        %1585 = vmatpush1.msra.mxu0 0.0
        %1586 = vmatprep.subr.mxu0 0.0
        %1587 = vmatpush1.msra.mxu0 0.0
        %1588 = vmatprep.subr.mxu0 0.0
        %1589 = vmatpush1.msra.mxu0 0.0
        %1590 = vmatprep.subr.mxu0 0.0
        %1591 = vmatpush1.msra.mxu0 0.0
        %1592 = vmatprep.mubr.f32.mxu0 0.0
        %1593 = vmatmul.mubr.f32.gmra.mrb[0].mxu0 %v1517
        %v1594 = vpop.f32.mrb[0].mxu0
        %v1595 = vadd.f32 0.0, %v1594
        %v1596 = vpop.f32.mrb[0].mxu0
        %1597 = vmatprep.mubr.f32.mxu0 0.0
        %1598 = vmatmul.mubr.f32.gmra.mrb[0].mxu0 %v1520
        %v1599 = vpop.f32.mrb[0].mxu0
        %v1600 = vadd.f32 0.0, %v1599
        %v1601 = vpop.f32.mrb[0].mxu0
        %1602 = vmatprep.mubr.f32.mxu0 0.0
        %1603 = vmatmul.mubr.f32.gmra.mrb[0].mxu0 %v1523
        %v1604 = vpop.f32.mrb[0].mxu0
        %v1605 = vadd.f32 0.0, %v1604
        %v1606 = vpop.f32.mrb[0].mxu0
        %1607 = vmatprep.mubr.f32.mxu0 0.0
        %1608 = vmatmul.mubr.f32.gmra.mrb[0].mxu0 %v1526
        %v1609 = vpop.f32.mrb[0].mxu0
        %v1610 = vadd.f32 0.0, %v1609
        %v1611 = vpop.f32.mrb[0].mxu0
        %1612 = vdwg.mxu0
        %v1613 = vrcp.pop %v1417
        %v1614 = vmul.f32 0.17677669, %v1613
        %v1615 = vrcp.pop %v1420
        %v1616 = vmul.f32 0.17677669, %v1615
        %v1617 = vrcp.pop %v1423
        %v1618 = vmul.f32 0.17677669, %v1617
        %v1619 = vrcp.pop %v1426
        %v1620 = vmul.f32 0.17677669, %v1619
        %v1621 = vmul.f32 %v1595, %v1614
        %v1622 = vmul.f32 %v1600, %v1616
        %v1623 = vmul.f32 %v1605, %v1618
        %v1624 = vmul.f32 %v1610, %v1620
        %v1625 = vmax.f32 %v492, %v504
        %v1626 = vmax.f32 %v498, %v510
        %v1627 = vmax.f32 %v1625, %v1626
        %v1628 = vrot.slane %v1627, 4
        %v1629 = vmax.f32 %v1627, %v1628
        %v1630 = vrot.slane %v1629, 2
        %v1631 = vmax.f32 %v1629, %v1630
        %v1632 = vrot.slane %v1631, 1
        %v1633 = vmax.f32 %v1631, %v1632
        %v1634 = vmax.f32 %v494, %v506
        %v1635 = vmax.f32 %v500, %v512
        %v1636 = vmax.f32 %v1634, %v1635
        %v1637 = vrot.slane %v1636, 4
        %v1638 = vmax.f32 %v1636, %v1637
        %v1639 = vrot.slane %v1638, 2
        %v1640 = vmax.f32 %v1638, %v1639
        %v1641 = vrot.slane %v1640, 1
        %v1642 = vmax.f32 %v1640, %v1641
        %v1643 = vsub.f32 %v492, %v1633
        %v1644 = vsub.f32 %v494, %v1642
        %v1645 = vsub.f32 %v498, %v1633
        %v1646 = vsub.f32 %v500, %v1642
        %v1647 = vsub.f32 %v504, %v1633
        %v1648 = vsub.f32 %v506, %v1642
        %v1649 = vsub.f32 %v510, %v1633
        %v1650 = vsub.f32 %v512, %v1642
        %v1651 = vmul.f32 %v1643, 1.442695
        %v1652 = vpow.pop %v1651
        %v1653 = vmul.f32 %v1644, 1.442695
        %v1654 = vpow.pop %v1653
        %v1655 = vmul.f32 %v1645, 1.442695
        %v1656 = vpow.pop %v1655
        %v1657 = vmul.f32 %v1646, 1.442695
        %v1658 = vpow.pop %v1657
        %v1659 = vmul.f32 %v1647, 1.442695
        %v1660 = vpow.pop %v1659
        %v1661 = vmul.f32 %v1648, 1.442695
        %v1662 = vpow.pop %v1661
        %v1663 = vmul.f32 %v1649, 1.442695
        %v1664 = vpow.pop %v1663
        %v1665 = vmul.f32 %v1650, 1.442695
        %v1666 = vpow.pop %v1665
        %v1667 = vadd.f32 %v1652, %v1656
        %v1668 = vadd.f32 %v1667, %v1660
        %v1669 = vadd.f32 %v1668, %v1664
        %v1670 = vrot.slane %v1669, 4
        %v1671 = vadd.f32 %v1669, %v1670
        %v1672 = vrot.slane %v1671, 2
        %v1673 = vadd.f32 %v1671, %v1672
        %v1674 = vrot.slane %v1673, 1
        %v1675 = vadd.f32 %v1673, %v1674
        %v1676 = vadd.f32 %v1654, %v1658
        %v1677 = vadd.f32 %v1676, %v1662
        %v1678 = vadd.f32 %v1677, %v1666
        %v1679 = vrot.slane %v1678, 4
        %v1680 = vadd.f32 %v1678, %v1679
        %v1681 = vrot.slane %v1680, 2
        %v1682 = vadd.f32 %v1680, %v1681
        %v1683 = vrot.slane %v1682, 1
        %v1684 = vadd.f32 %v1682, %v1683
        %v1685 = vrcp.pop %v1675
        %v1686 = vmul.f32 1.0, %v1685
        %v1687 = vrcp.pop %v1684
        %v1688 = vmul.f32 1.0, %v1687
        %v1689 = vmul.f32 %v1652, %v1686
        %v1690 = vmul.f32 %v1654, %v1688
        %v1691 = vmul.f32 %v1656, %v1686
        %v1692 = vmul.f32 %v1658, %v1688
        %v1693 = vmul.f32 %v1660, %v1686
        %v1694 = vmul.f32 %v1662, %v1688
        %v1695 = vmul.f32 %v1664, %v1686
        %v1696 = vmul.f32 %v1666, %v1688
        %v1697 = vmax.f32 %v717, %v719
        %1698 = vmax.xlane.f32.xlu0 %v1697
        %v1699 = vpop.xlane.xlu0 %1698
        %v1700 = vmax.f32 %v723, %v725
        %1701 = vmax.xlane.f32.xlu0 %v1700
        %v1702 = vpop.xlane.xlu0 %1701
        %v1703 = vmax.f32 %v729, %v731
        %1704 = vmax.xlane.f32.xlu0 %v1703
        %v1705 = vpop.xlane.xlu0 %1704
        %v1706 = vmax.f32 %v735, %v737
        %1707 = vmax.xlane.f32.xlu0 %v1706
        %v1708 = vpop.xlane.xlu0 %1707
        %v1709 = vsub.f32 %v717, %v1699
        %v1710 = vsub.f32 %v719, %v1699
        %v1711 = vsub.f32 %v723, %v1702
        %v1712 = vsub.f32 %v725, %v1702
        %v1713 = vsub.f32 %v729, %v1705
        %v1714 = vsub.f32 %v731, %v1705
        %v1715 = vsub.f32 %v735, %v1708
        %v1716 = vsub.f32 %v737, %v1708
        %v1717 = vmul.f32 %v1709, 1.442695
        %v1718 = vpow.pop %v1717
        %v1719 = vmul.f32 %v1710, 1.442695
        %v1720 = vpow.pop %v1719
        %v1721 = vmul.f32 %v1711, 1.442695
        %v1722 = vpow.pop %v1721
        %v1723 = vmul.f32 %v1712, 1.442695
        %v1724 = vpow.pop %v1723
        %v1725 = vmul.f32 %v1713, 1.442695
        %v1726 = vpow.pop %v1725
        %v1727 = vmul.f32 %v1714, 1.442695
        %v1728 = vpow.pop %v1727
        %v1729 = vmul.f32 %v1715, 1.442695
        %v1730 = vpow.pop %v1729
        %v1731 = vmul.f32 %v1716, 1.442695
        %v1732 = vpow.pop %v1731
        %v1733 = vadd.f32 %v1718, %v1720
        %1734 = vadd.xlane.f32.xlu0 %v1733
        %v1735 = vpop.xlane.xlu0 %1734
        %v1736 = vadd.f32 %v1722, %v1724
        %1737 = vadd.xlane.f32.xlu0 %v1736
        %v1738 = vpop.xlane.xlu0 %1737
        %v1739 = vadd.f32 %v1726, %v1728
        %1740 = vadd.xlane.f32.xlu0 %v1739
        %v1741 = vpop.xlane.xlu0 %1740
        %v1742 = vadd.f32 %v1730, %v1732
        %1743 = vadd.xlane.f32.xlu0 %v1742
        %v1744 = vpop.xlane.xlu0 %1743
        %1745 = vmatprep.subr.mxu0 %v944
        %1746 = vmatpush1.xpose.msra.mxu0 %v942
        %1747 = vmatprep.subr.mxu0 %v950
        %1748 = vmatpush1.xpose.msra.mxu0 %v948
        %1749 = vmatprep.subr.mxu0 %v956
        %1750 = vmatpush1.xpose.msra.mxu0 %v954
        %1751 = vmatprep.subr.mxu0 %v962
        %1752 = vmatpush1.xpose.msra.mxu0 %v960
        %1753 = vmatprep.subr.mxu0 0.0
        %1754 = vmatpush1.xpose.msra.mxu0 0.0
        %1755 = vmatprep.subr.mxu0 0.0
        %1756 = vmatpush1.xpose.msra.mxu0 0.0
        %1757 = vmatprep.subr.mxu0 0.0
        %1758 = vmatpush1.xpose.msra.mxu0 0.0
        %1759 = vmatprep.subr.mxu0 0.0
        %1760 = vmatpush1.xpose.msra.mxu0 0.0
        %1761 = vmatprep.subr.mxu0 0.0
        %1762 = vmatpush1.xpose.msra.mxu0 0.0
        %1763 = vmatprep.subr.mxu0 0.0
        %1764 = vmatpush1.xpose.msra.mxu0 0.0
        %1765 = vmatprep.subr.mxu0 0.0
        %1766 = vmatpush1.xpose.msra.mxu0 0.0
        %1767 = vmatprep.subr.mxu0 0.0
        %1768 = vmatpush1.xpose.msra.mxu0 0.0
        %1769 = vmatprep.subr.mxu0 0.0
        %1770 = vmatpush1.xpose.msra.mxu0 0.0
        %1771 = vmatprep.subr.mxu0 0.0
        %1772 = vmatpush1.xpose.msra.mxu0 0.0
        %1773 = vmatprep.subr.mxu0 0.0
        %1774 = vmatpush1.xpose.msra.mxu0 0.0
        %1775 = vmatprep.subr.mxu0 0.0
        %1776 = vmatpush1.xpose.msra.mxu0 0.0
        %1777 = vmatprep.subr.mxu0 0.0
        %1778 = vmatpush1.xpose.msra.mxu0 0.0
        %1779 = vmatprep.subr.mxu0 0.0
        %1780 = vmatpush1.xpose.msra.mxu0 0.0
        %1781 = vmatprep.subr.mxu0 0.0
        %1782 = vmatpush1.xpose.msra.mxu0 0.0
        %1783 = vmatprep.subr.mxu0 0.0
        %1784 = vmatpush1.xpose.msra.mxu0 0.0
        %1785 = vmatprep.subr.mxu0 0.0
        %1786 = vmatpush1.xpose.msra.mxu0 0.0
        %1787 = vmatprep.subr.mxu0 0.0
        %1788 = vmatpush1.xpose.msra.mxu0 0.0
        %1789 = vmatprep.subr.mxu0 0.0
        %1790 = vmatpush1.xpose.msra.mxu0 0.0
        %1791 = vmatprep.subr.mxu0 0.0
        %1792 = vmatpush1.xpose.msra.mxu0 0.0
        %1793 = vmatprep.subr.mxu0 0.0
        %1794 = vmatpush1.xpose.msra.mxu0 0.0
        %1795 = vmatprep.subr.mxu0 0.0
        %1796 = vmatpush1.xpose.msra.mxu0 0.0
        %1797 = vmatprep.subr.mxu0 0.0
        %1798 = vmatpush1.xpose.msra.mxu0 0.0
        %1799 = vmatprep.subr.mxu0 0.0
        %1800 = vmatpush1.xpose.msra.mxu0 0.0
        %1801 = vmatprep.subr.mxu0 0.0
        %1802 = vmatpush1.xpose.msra.mxu0 0.0
        %1803 = vmatprep.subr.mxu0 0.0
        %1804 = vmatpush1.xpose.msra.mxu0 0.0
        %1805 = vmatprep.subr.mxu0 0.0
        %1806 = vmatpush1.xpose.msra.mxu0 0.0
        %1807 = vmatprep.subr.mxu0 0.0
        %1808 = vmatpush1.xpose.msra.mxu0 0.0
        %1809 = vmatprep.mubr.f32.mxu0 %v1720
        %1810 = vmatmul.mubr.f32.gmra.mrb[0].mxu0 %v1718
        %v1811 = vpop.f32.mrb[0].mxu0
        %v1812 = vadd.f32 0.0, %v1811
        %v1813 = vpop.f32.mrb[0].mxu0
        %1814 = vmatprep.mubr.f32.mxu0 %v1724
        %1815 = vmatmul.mubr.f32.gmra.mrb[0].mxu0 %v1722
        %v1816 = vpop.f32.mrb[0].mxu0
        %v1817 = vadd.f32 0.0, %v1816
        %v1818 = vpop.f32.mrb[0].mxu0
        %1819 = vmatprep.mubr.f32.mxu0 %v1728
        %1820 = vmatmul.mubr.f32.gmra.mrb[0].mxu0 %v1726
        %v1821 = vpop.f32.mrb[0].mxu0
        %v1822 = vadd.f32 0.0, %v1821
        %v1823 = vpop.f32.mrb[0].mxu0
        %1824 = vmatprep.mubr.f32.mxu0 %v1732
        %1825 = vmatmul.mubr.f32.gmra.mrb[0].mxu0 %v1730
        %v1826 = vpop.f32.mrb[0].mxu0
        %v1827 = vadd.f32 0.0, %v1826
        %v1828 = vpop.f32.mrb[0].mxu0
        %1829 = vdwg.mxu0
        %v1830 = vld [vmem:[%s4 + $0x40] sm:$0xff]
        %v1831 = vld [vmem:[%s4 + $0x48] sm:$0xff]
        %v1832 = vld [vmem:[%s4 + $0x50] sm:$0xff]
        %v1833 = vld [vmem:[%s4 + $0x58] sm:$0xff]
        %v1835 = vsel %vm1197, %v1812, 0
        %v1838 = vsel %vm1197, %v1817, 0
        %v1841 = vsel %vm1197, %v1822, 0
        %v1844 = vsel %vm1197, %v1827, 0
        %1846 = vmatprep.subr.mxu0 0.0
        %1847 = vmatpush1.msra.mxu0 %v1830
        %1848 = vmatprep.subr.mxu0 0.0
        %1849 = vmatpush1.msra.mxu0 %v1831
        %1850 = vmatprep.subr.mxu0 0.0
        %1851 = vmatpush1.msra.mxu0 %v1832
        %1852 = vmatprep.subr.mxu0 0.0
        %1853 = vmatpush1.msra.mxu0 %v1833
        %1854 = vmatprep.subr.mxu0 0.0
        %1855 = vmatpush1.msra.mxu0 0.0
        %1856 = vmatprep.subr.mxu0 0.0
        %1857 = vmatpush1.msra.mxu0 0.0
        %1858 = vmatprep.subr.mxu0 0.0
        %1859 = vmatpush1.msra.mxu0 0.0
        %1860 = vmatprep.subr.mxu0 0.0
        %1861 = vmatpush1.msra.mxu0 0.0
        %1862 = vmatprep.subr.mxu0 0.0
        %1863 = vmatpush1.msra.mxu0 0.0
        %1864 = vmatprep.subr.mxu0 0.0
        %1865 = vmatpush1.msra.mxu0 0.0
        %1866 = vmatprep.subr.mxu0 0.0
        %1867 = vmatpush1.msra.mxu0 0.0
        %1868 = vmatprep.subr.mxu0 0.0
        %1869 = vmatpush1.msra.mxu0 0.0
        %1870 = vmatprep.subr.mxu0 0.0
        %1871 = vmatpush1.msra.mxu0 0.0
        %1872 = vmatprep.subr.mxu0 0.0
        %1873 = vmatpush1.msra.mxu0 0.0
        %1874 = vmatprep.subr.mxu0 0.0
        %1875 = vmatpush1.msra.mxu0 0.0
        %1876 = vmatprep.subr.mxu0 0.0
        %1877 = vmatpush1.msra.mxu0 0.0
        %1878 = vmatprep.subr.mxu0 0.0
        %1879 = vmatpush1.msra.mxu0 0.0
        %1880 = vmatprep.subr.mxu0 0.0
        %1881 = vmatpush1.msra.mxu0 0.0
        %1882 = vmatprep.subr.mxu0 0.0
        %1883 = vmatpush1.msra.mxu0 0.0
        %1884 = vmatprep.subr.mxu0 0.0
        %1885 = vmatpush1.msra.mxu0 0.0
        %1886 = vmatprep.subr.mxu0 0.0
        %1887 = vmatpush1.msra.mxu0 0.0
        %1888 = vmatprep.subr.mxu0 0.0
        %1889 = vmatpush1.msra.mxu0 0.0
        %1890 = vmatprep.subr.mxu0 0.0
        %1891 = vmatpush1.msra.mxu0 0.0
        %1892 = vmatprep.subr.mxu0 0.0
        %1893 = vmatpush1.msra.mxu0 0.0
        %1894 = vmatprep.subr.mxu0 0.0
        %1895 = vmatpush1.msra.mxu0 0.0
        %1896 = vmatprep.subr.mxu0 0.0
        %1897 = vmatpush1.msra.mxu0 0.0
        %1898 = vmatprep.subr.mxu0 0.0
        %1899 = vmatpush1.msra.mxu0 0.0
        %1900 = vmatprep.subr.mxu0 0.0
        %1901 = vmatpush1.msra.mxu0 0.0
        %1902 = vmatprep.subr.mxu0 0.0
        %1903 = vmatpush1.msra.mxu0 0.0
        %1904 = vmatprep.subr.mxu0 0.0
        %1905 = vmatpush1.msra.mxu0 0.0
        %1906 = vmatprep.subr.mxu0 0.0
        %1907 = vmatpush1.msra.mxu0 0.0
        %1908 = vmatprep.subr.mxu0 0.0
        %1909 = vmatpush1.msra.mxu0 0.0
        %1910 = vmatprep.mubr.f32.mxu0 0.0
        %1911 = vmatmul.mubr.f32.gmra.mrb[0].mxu0 %v1835
        %v1912 = vpop.f32.mrb[0].mxu0
        %v1913 = vadd.f32 0.0, %v1912
        %v1914 = vpop.f32.mrb[0].mxu0
        %1915 = vmatprep.mubr.f32.mxu0 0.0
        %1916 = vmatmul.mubr.f32.gmra.mrb[0].mxu0 %v1838
        %v1917 = vpop.f32.mrb[0].mxu0
        %v1918 = vadd.f32 0.0, %v1917
        %v1919 = vpop.f32.mrb[0].mxu0
        %1920 = vmatprep.mubr.f32.mxu0 0.0
        %1921 = vmatmul.mubr.f32.gmra.mrb[0].mxu0 %v1841
        %v1922 = vpop.f32.mrb[0].mxu0
        %v1923 = vadd.f32 0.0, %v1922
        %v1924 = vpop.f32.mrb[0].mxu0
        %1925 = vmatprep.mubr.f32.mxu0 0.0
        %1926 = vmatmul.mubr.f32.gmra.mrb[0].mxu0 %v1844
        %v1927 = vpop.f32.mrb[0].mxu0
        %v1928 = vadd.f32 0.0, %v1927
        %v1929 = vpop.f32.mrb[0].mxu0
        %1930 = vdwg.mxu0
        %v1931 = vrcp.pop %v1735
        %v1932 = vmul.f32 0.17677669, %v1931
        %v1933 = vrcp.pop %v1738
        %v1934 = vmul.f32 0.17677669, %v1933
        %v1935 = vrcp.pop %v1741
        %v1936 = vmul.f32 0.17677669, %v1935
        %v1937 = vrcp.pop %v1744
        %v1938 = vmul.f32 0.17677669, %v1937
        %v1939 = vmul.f32 %v1913, %v1932
        %v1940 = vmul.f32 %v1918, %v1934
        %v1941 = vmul.f32 %v1923, %v1936
        %v1942 = vmul.f32 %v1928, %v1938
        %v1943 = vmax.f32 %v516, %v528
        %v1944 = vmax.f32 %v522, %v534
        %v1945 = vmax.f32 %v1943, %v1944
        %v1946 = vrot.slane %v1945, 4
        %v1947 = vmax.f32 %v1945, %v1946
        %v1948 = vrot.slane %v1947, 2
        %v1949 = vmax.f32 %v1947, %v1948
        %v1950 = vrot.slane %v1949, 1
        %v1951 = vmax.f32 %v1949, %v1950
        %v1952 = vmax.f32 %v518, %v530
        %v1953 = vmax.f32 %v524, %v536
        %v1954 = vmax.f32 %v1952, %v1953
        %v1955 = vrot.slane %v1954, 4
        %v1956 = vmax.f32 %v1954, %v1955
        %v1957 = vrot.slane %v1956, 2
        %v1958 = vmax.f32 %v1956, %v1957
        %v1959 = vrot.slane %v1958, 1
        %v1960 = vmax.f32 %v1958, %v1959
        %v1961 = vsub.f32 %v516, %v1951
        %v1962 = vsub.f32 %v518, %v1960
        %v1963 = vsub.f32 %v522, %v1951
        %v1964 = vsub.f32 %v524, %v1960
        %v1965 = vsub.f32 %v528, %v1951
        %v1966 = vsub.f32 %v530, %v1960
        %v1967 = vsub.f32 %v534, %v1951
        %v1968 = vsub.f32 %v536, %v1960
        %v1969 = vmul.f32 %v1961, 1.442695
        %v1970 = vpow.pop %v1969
        %v1971 = vmul.f32 %v1962, 1.442695
        %v1972 = vpow.pop %v1971
        %v1973 = vmul.f32 %v1963, 1.442695
        %v1974 = vpow.pop %v1973
        %v1975 = vmul.f32 %v1964, 1.442695
        %v1976 = vpow.pop %v1975
        %v1977 = vmul.f32 %v1965, 1.442695
        %v1978 = vpow.pop %v1977
        %v1979 = vmul.f32 %v1966, 1.442695
        %v1980 = vpow.pop %v1979
        %v1981 = vmul.f32 %v1967, 1.442695
        %v1982 = vpow.pop %v1981
        %v1983 = vmul.f32 %v1968, 1.442695
        %v1984 = vpow.pop %v1983
        %v1985 = vadd.f32 %v1970, %v1974
        %v1986 = vadd.f32 %v1985, %v1978
        %v1987 = vadd.f32 %v1986, %v1982
        %v1988 = vrot.slane %v1987, 4
        %v1989 = vadd.f32 %v1987, %v1988
        %v1990 = vrot.slane %v1989, 2
        %v1991 = vadd.f32 %v1989, %v1990
        %v1992 = vrot.slane %v1991, 1
        %v1993 = vadd.f32 %v1991, %v1992
        %v1994 = vadd.f32 %v1972, %v1976
        %v1995 = vadd.f32 %v1994, %v1980
        %v1996 = vadd.f32 %v1995, %v1984
        %v1997 = vrot.slane %v1996, 4
        %v1998 = vadd.f32 %v1996, %v1997
        %v1999 = vrot.slane %v1998, 2
        %v2000 = vadd.f32 %v1998, %v1999
        %v2001 = vrot.slane %v2000, 1
        %v2002 = vadd.f32 %v2000, %v2001
        %v2003 = vrcp.pop %v1993
        %v2004 = vmul.f32 1.0, %v2003
        %v2005 = vrcp.pop %v2002
        %v2006 = vmul.f32 1.0, %v2005
        %v2007 = vmul.f32 %v1970, %v2004
        %v2008 = vmul.f32 %v1972, %v2006
        %v2009 = vmul.f32 %v1974, %v2004
        %v2010 = vmul.f32 %v1976, %v2006
        %v2011 = vmul.f32 %v1978, %v2004
        %v2012 = vmul.f32 %v1980, %v2006
        %v2013 = vmul.f32 %v1982, %v2004
        %v2014 = vmul.f32 %v1984, %v2006
        %v2015 = vmax.f32 %v741, %v743
        %2016 = vmax.xlane.f32.xlu0 %v2015
        %v2017 = vpop.xlane.xlu0 %2016
        %v2018 = vmax.f32 %v747, %v749
        %2019 = vmax.xlane.f32.xlu0 %v2018
        %v2020 = vpop.xlane.xlu0 %2019
        %v2021 = vmax.f32 %v753, %v755
        %2022 = vmax.xlane.f32.xlu0 %v2021
        %v2023 = vpop.xlane.xlu0 %2022
        %v2024 = vmax.f32 %v759, %v761
        %2025 = vmax.xlane.f32.xlu0 %v2024
        %v2026 = vpop.xlane.xlu0 %2025
        %v2027 = vsub.f32 %v741, %v2017
        %v2028 = vsub.f32 %v743, %v2017
        %v2029 = vsub.f32 %v747, %v2020
        %v2030 = vsub.f32 %v749, %v2020
        %v2031 = vsub.f32 %v753, %v2023
        %v2032 = vsub.f32 %v755, %v2023
        %v2033 = vsub.f32 %v759, %v2026
        %v2034 = vsub.f32 %v761, %v2026
        %v2035 = vmul.f32 %v2027, 1.442695
        %v2036 = vpow.pop %v2035
        %v2037 = vmul.f32 %v2028, 1.442695
        %v2038 = vpow.pop %v2037
        %v2039 = vmul.f32 %v2029, 1.442695
        %v2040 = vpow.pop %v2039
        %v2041 = vmul.f32 %v2030, 1.442695
        %v2042 = vpow.pop %v2041
        %v2043 = vmul.f32 %v2031, 1.442695
        %v2044 = vpow.pop %v2043
        %v2045 = vmul.f32 %v2032, 1.442695
        %v2046 = vpow.pop %v2045
        %v2047 = vmul.f32 %v2033, 1.442695
        %v2048 = vpow.pop %v2047
        %v2049 = vmul.f32 %v2034, 1.442695
        %v2050 = vpow.pop %v2049
        %v2051 = vadd.f32 %v2036, %v2038
        %2052 = vadd.xlane.f32.xlu0 %v2051
        %v2053 = vpop.xlane.xlu0 %2052
        %v2054 = vadd.f32 %v2040, %v2042
        %2055 = vadd.xlane.f32.xlu0 %v2054
        %v2056 = vpop.xlane.xlu0 %2055
        %v2057 = vadd.f32 %v2044, %v2046
        %2058 = vadd.xlane.f32.xlu0 %v2057
        %v2059 = vpop.xlane.xlu0 %2058
        %v2060 = vadd.f32 %v2048, %v2050
        %2061 = vadd.xlane.f32.xlu0 %v2060
        %v2062 = vpop.xlane.xlu0 %2061
        %2063 = vmatprep.subr.mxu0 %v968
        %2064 = vmatpush1.xpose.msra.mxu0 %v966
        %2065 = vmatprep.subr.mxu0 %v974
        %2066 = vmatpush1.xpose.msra.mxu0 %v972
        %2067 = vmatprep.subr.mxu0 %v980
        %2068 = vmatpush1.xpose.msra.mxu0 %v978
        %2069 = vmatprep.subr.mxu0 %v986
        %2070 = vmatpush1.xpose.msra.mxu0 %v984
        %2071 = vmatprep.subr.mxu0 0.0
        %2072 = vmatpush1.xpose.msra.mxu0 0.0
        %2073 = vmatprep.subr.mxu0 0.0
        %2074 = vmatpush1.xpose.msra.mxu0 0.0
        %2075 = vmatprep.subr.mxu0 0.0
        %2076 = vmatpush1.xpose.msra.mxu0 0.0
        %2077 = vmatprep.subr.mxu0 0.0
        %2078 = vmatpush1.xpose.msra.mxu0 0.0
        %2079 = vmatprep.subr.mxu0 0.0
        %2080 = vmatpush1.xpose.msra.mxu0 0.0
        %2081 = vmatprep.subr.mxu0 0.0
        %2082 = vmatpush1.xpose.msra.mxu0 0.0
        %2083 = vmatprep.subr.mxu0 0.0
        %2084 = vmatpush1.xpose.msra.mxu0 0.0
        %2085 = vmatprep.subr.mxu0 0.0
        %2086 = vmatpush1.xpose.msra.mxu0 0.0
        %2087 = vmatprep.subr.mxu0 0.0
        %2088 = vmatpush1.xpose.msra.mxu0 0.0
        %2089 = vmatprep.subr.mxu0 0.0
        %2090 = vmatpush1.xpose.msra.mxu0 0.0
        %2091 = vmatprep.subr.mxu0 0.0
        %2092 = vmatpush1.xpose.msra.mxu0 0.0
        %2093 = vmatprep.subr.mxu0 0.0
        %2094 = vmatpush1.xpose.msra.mxu0 0.0
        %2095 = vmatprep.subr.mxu0 0.0
        %2096 = vmatpush1.xpose.msra.mxu0 0.0
        %2097 = vmatprep.subr.mxu0 0.0
        %2098 = vmatpush1.xpose.msra.mxu0 0.0
        %2099 = vmatprep.subr.mxu0 0.0
        %2100 = vmatpush1.xpose.msra.mxu0 0.0
        %2101 = vmatprep.subr.mxu0 0.0
        %2102 = vmatpush1.xpose.msra.mxu0 0.0
        %2103 = vmatprep.subr.mxu0 0.0
        %2104 = vmatpush1.xpose.msra.mxu0 0.0
        %2105 = vmatprep.subr.mxu0 0.0
        %2106 = vmatpush1.xpose.msra.mxu0 0.0
        %2107 = vmatprep.subr.mxu0 0.0
        %2108 = vmatpush1.xpose.msra.mxu0 0.0
        %2109 = vmatprep.subr.mxu0 0.0
        %2110 = vmatpush1.xpose.msra.mxu0 0.0
        %2111 = vmatprep.subr.mxu0 0.0
        %2112 = vmatpush1.xpose.msra.mxu0 0.0
        %2113 = vmatprep.subr.mxu0 0.0
        %2114 = vmatpush1.xpose.msra.mxu0 0.0
        %2115 = vmatprep.subr.mxu0 0.0
        %2116 = vmatpush1.xpose.msra.mxu0 0.0
        %2117 = vmatprep.subr.mxu0 0.0
        %2118 = vmatpush1.xpose.msra.mxu0 0.0
        %2119 = vmatprep.subr.mxu0 0.0
        %2120 = vmatpush1.xpose.msra.mxu0 0.0
        %2121 = vmatprep.subr.mxu0 0.0
        %2122 = vmatpush1.xpose.msra.mxu0 0.0
        %2123 = vmatprep.subr.mxu0 0.0
        %2124 = vmatpush1.xpose.msra.mxu0 0.0
        %2125 = vmatprep.subr.mxu0 0.0
        %2126 = vmatpush1.xpose.msra.mxu0 0.0
        %2127 = vmatprep.mubr.f32.mxu0 %v2038
        %2128 = vmatmul.mubr.f32.gmra.mrb[0].mxu0 %v2036
        %v2129 = vpop.f32.mrb[0].mxu0
        %v2130 = vadd.f32 0.0, %v2129
        %v2131 = vpop.f32.mrb[0].mxu0
        %2132 = vmatprep.mubr.f32.mxu0 %v2042
        %2133 = vmatmul.mubr.f32.gmra.mrb[0].mxu0 %v2040
        %v2134 = vpop.f32.mrb[0].mxu0
        %v2135 = vadd.f32 0.0, %v2134
        %v2136 = vpop.f32.mrb[0].mxu0
        %2137 = vmatprep.mubr.f32.mxu0 %v2046
        %2138 = vmatmul.mubr.f32.gmra.mrb[0].mxu0 %v2044
        %v2139 = vpop.f32.mrb[0].mxu0
        %v2140 = vadd.f32 0.0, %v2139
        %v2141 = vpop.f32.mrb[0].mxu0
        %2142 = vmatprep.mubr.f32.mxu0 %v2050
        %2143 = vmatmul.mubr.f32.gmra.mrb[0].mxu0 %v2048
        %v2144 = vpop.f32.mrb[0].mxu0
        %v2145 = vadd.f32 0.0, %v2144
        %v2146 = vpop.f32.mrb[0].mxu0
        %2147 = vdwg.mxu0
        %v2148 = vld [vmem:[%s4 + $0x60] sm:$0xff]
        %v2149 = vld [vmem:[%s4 + $0x68] sm:$0xff]
        %v2150 = vld [vmem:[%s4 + $0x70] sm:$0xff]
        %v2151 = vld [vmem:[%s4 + $0x78] sm:$0xff]
        %v2153 = vsel %vm1197, %v2130, 0
        %v2156 = vsel %vm1197, %v2135, 0
        %v2159 = vsel %vm1197, %v2140, 0
        %v2162 = vsel %vm1197, %v2145, 0
        %2164 = vmatprep.subr.mxu0 0.0
        %2165 = vmatpush1.msra.mxu0 %v2148
        %2166 = vmatprep.subr.mxu0 0.0
        %2167 = vmatpush1.msra.mxu0 %v2149
        %2168 = vmatprep.subr.mxu0 0.0
        %2169 = vmatpush1.msra.mxu0 %v2150
        %2170 = vmatprep.subr.mxu0 0.0
        %2171 = vmatpush1.msra.mxu0 %v2151
        %2172 = vmatprep.subr.mxu0 0.0
        %2173 = vmatpush1.msra.mxu0 0.0
        %2174 = vmatprep.subr.mxu0 0.0
        %2175 = vmatpush1.msra.mxu0 0.0
        %2176 = vmatprep.subr.mxu0 0.0
        %2177 = vmatpush1.msra.mxu0 0.0
        %2178 = vmatprep.subr.mxu0 0.0
        %2179 = vmatpush1.msra.mxu0 0.0
        %2180 = vmatprep.subr.mxu0 0.0
        %2181 = vmatpush1.msra.mxu0 0.0
        %2182 = vmatprep.subr.mxu0 0.0
        %2183 = vmatpush1.msra.mxu0 0.0
        %2184 = vmatprep.subr.mxu0 0.0
        %2185 = vmatpush1.msra.mxu0 0.0
        %2186 = vmatprep.subr.mxu0 0.0
        %2187 = vmatpush1.msra.mxu0 0.0
        %2188 = vmatprep.subr.mxu0 0.0
        %2189 = vmatpush1.msra.mxu0 0.0
        %2190 = vmatprep.subr.mxu0 0.0
        %2191 = vmatpush1.msra.mxu0 0.0
        %2192 = vmatprep.subr.mxu0 0.0
        %2193 = vmatpush1.msra.mxu0 0.0
        %2194 = vmatprep.subr.mxu0 0.0
        %2195 = vmatpush1.msra.mxu0 0.0
        %2196 = vmatprep.subr.mxu0 0.0
        %2197 = vmatpush1.msra.mxu0 0.0
        %2198 = vmatprep.subr.mxu0 0.0
        %2199 = vmatpush1.msra.mxu0 0.0
        %2200 = vmatprep.subr.mxu0 0.0
        %2201 = vmatpush1.msra.mxu0 0.0
        %2202 = vmatprep.subr.mxu0 0.0
        %2203 = vmatpush1.msra.mxu0 0.0
        %2204 = vmatprep.subr.mxu0 0.0
        %2205 = vmatpush1.msra.mxu0 0.0
        %2206 = vmatprep.subr.mxu0 0.0
        %2207 = vmatpush1.msra.mxu0 0.0
        %2208 = vmatprep.subr.mxu0 0.0
        %2209 = vmatpush1.msra.mxu0 0.0
        %2210 = vmatprep.subr.mxu0 0.0
        %2211 = vmatpush1.msra.mxu0 0.0
        %2212 = vmatprep.subr.mxu0 0.0
        %2213 = vmatpush1.msra.mxu0 0.0
        %2214 = vmatprep.subr.mxu0 0.0
        %2215 = vmatpush1.msra.mxu0 0.0
        %2216 = vmatprep.subr.mxu0 0.0
        %2217 = vmatpush1.msra.mxu0 0.0
        %2218 = vmatprep.subr.mxu0 0.0
        %2219 = vmatpush1.msra.mxu0 0.0
        %2220 = vmatprep.subr.mxu0 0.0
        %2221 = vmatpush1.msra.mxu0 0.0
        %2222 = vmatprep.subr.mxu0 0.0
        %2223 = vmatpush1.msra.mxu0 0.0
        %2224 = vmatprep.subr.mxu0 0.0
        %2225 = vmatpush1.msra.mxu0 0.0
        %2226 = vmatprep.subr.mxu0 0.0
        %2227 = vmatpush1.msra.mxu0 0.0
        %2228 = vmatprep.mubr.f32.mxu0 0.0
        %2229 = vmatmul.mubr.f32.gmra.mrb[0].mxu0 %v2153
        %v2230 = vpop.f32.mrb[0].mxu0
        %v2231 = vadd.f32 0.0, %v2230
        %v2232 = vpop.f32.mrb[0].mxu0
        %2233 = vmatprep.mubr.f32.mxu0 0.0
        %2234 = vmatmul.mubr.f32.gmra.mrb[0].mxu0 %v2156
        %v2235 = vpop.f32.mrb[0].mxu0
        %v2236 = vadd.f32 0.0, %v2235
        %v2237 = vpop.f32.mrb[0].mxu0
        %2238 = vmatprep.mubr.f32.mxu0 0.0
        %2239 = vmatmul.mubr.f32.gmra.mrb[0].mxu0 %v2159
        %v2240 = vpop.f32.mrb[0].mxu0
        %v2241 = vadd.f32 0.0, %v2240
        %v2242 = vpop.f32.mrb[0].mxu0
        %2243 = vmatprep.mubr.f32.mxu0 0.0
        %2244 = vmatmul.mubr.f32.gmra.mrb[0].mxu0 %v2162
        %v2245 = vpop.f32.mrb[0].mxu0
        %v2246 = vadd.f32 0.0, %v2245
        %v2247 = vpop.f32.mrb[0].mxu0
        %2248 = vdwg.mxu0
        %v2249 = vrcp.pop %v2053
        %v2250 = vmul.f32 0.17677669, %v2249
        %v2251 = vrcp.pop %v2056
        %v2252 = vmul.f32 0.17677669, %v2251
        %v2253 = vrcp.pop %v2059
        %v2254 = vmul.f32 0.17677669, %v2253
        %v2255 = vrcp.pop %v2062
        %v2256 = vmul.f32 0.17677669, %v2255
        %v2257 = vmul.f32 %v2231, %v2250
        %v2258 = vmul.f32 %v2236, %v2252
        %v2259 = vmul.f32 %v2241, %v2254
        %v2260 = vmul.f32 %v2246, %v2256
        %v2261 = vld [vmem:[%s5] sm:$0xf]
        %2263 = vset.pattern.permute.xlu0 0
        %2264 = vperm.xlu0 %2263, %v2261
        %v2265 = vpop.permute.xlu0 %2264
        %2267 = vxpose.xlu0.b32.start [1/16] %v1303, 128
        %2268 = vxpose.xlu0.b32.cont [2/16] %v1304, 128
        %2269 = vxpose.xlu0.b32.cont [3/16] %v1305, 128
        %2270 = vxpose.xlu0.b32.cont [4/16] %v1306, 128
        %2271 = vxpose.xlu0.b32.cont [5/16] %v1621, 128
        %2272 = vxpose.xlu0.b32.cont [6/16] %v1622, 128
        %2273 = vxpose.xlu0.b32.cont [7/16] %v1623, 128
        %2274 = vxpose.xlu0.b32.cont [8/16] %v1624, 128
        %2275 = vxpose.xlu0.b32.cont [9/16] %v1939, 128
        %2276 = vxpose.xlu0.b32.cont [10/16] %v1940, 128
        %2277 = vxpose.xlu0.b32.cont [11/16] %v1941, 128
        %2278 = vxpose.xlu0.b32.cont [12/16] %v1942, 128
        %2279 = vxpose.xlu0.b32.cont [13/16] %v2257, 128
        %2280 = vxpose.xlu0.b32.cont [14/16] %v2258, 128
        %2281 = vxpose.xlu0.b32.cont [15/16] %v2259, 128
        %2282 = vxpose.xlu0.b32.end [16/16] %v2260, 128
        %v2283 = vpop.trf.xlu0
        %v2284 = vpop.trf.xlu0
        %v2285 = vpop.trf.xlu0
        %v2286 = vpop.trf.xlu0
        %v2287 = vpop.trf.xlu0
        %v2288 = vpop.trf.xlu0
        %v2289 = vpop.trf.xlu0
        %v2290 = vpop.trf.xlu0
        %v2291 = vpop.trf.xlu0
        %v2292 = vpop.trf.xlu0
        %v2293 = vpop.trf.xlu0
        %v2294 = vpop.trf.xlu0
        %v2295 = vpop.trf.xlu0
        %v2296 = vpop.trf.xlu0
        %v2297 = vpop.trf.xlu0
        %v2298 = vpop.trf.xlu0
        %2299 = vmatprep.subr.mxu0 %v1053
        %2300 = vmatpush1.msra.mxu0 %v1052
        %2301 = vmatprep.subr.mxu0 %v1055
        %2302 = vmatpush1.msra.mxu0 %v1054
        %2303 = vmatprep.subr.mxu0 %v1057
        %2304 = vmatpush1.msra.mxu0 %v1056
        %2305 = vmatprep.subr.mxu0 %v1059
        %2306 = vmatpush1.msra.mxu0 %v1058
        %2307 = vmatprep.subr.mxu0 %v1372
        %2308 = vmatpush1.msra.mxu0 %v1371
        %2309 = vmatprep.subr.mxu0 %v1374
        %2310 = vmatpush1.msra.mxu0 %v1373
        %2311 = vmatprep.subr.mxu0 %v1376
        %2312 = vmatpush1.msra.mxu0 %v1375
        %2313 = vmatprep.subr.mxu0 %v1378
        %2314 = vmatpush1.msra.mxu0 %v1377
        %2315 = vmatprep.subr.mxu0 %v1690
        %2316 = vmatpush1.msra.mxu0 %v1689
        %2317 = vmatprep.subr.mxu0 %v1692
        %2318 = vmatpush1.msra.mxu0 %v1691
        %2319 = vmatprep.subr.mxu0 %v1694
        %2320 = vmatpush1.msra.mxu0 %v1693
        %2321 = vmatprep.subr.mxu0 %v1696
        %2322 = vmatpush1.msra.mxu0 %v1695
        %2323 = vmatprep.subr.mxu0 %v2008
        %2324 = vmatpush1.msra.mxu0 %v2007
        %2325 = vmatprep.subr.mxu0 %v2010
        %2326 = vmatpush1.msra.mxu0 %v2009
        %2327 = vmatprep.subr.mxu0 %v2012
        %2328 = vmatpush1.msra.mxu0 %v2011
        %2329 = vmatprep.subr.mxu0 %v2014
        %2330 = vmatpush1.msra.mxu0 %v2013
        %2331 = vmatprep.subr.mxu0 0.0
        %2332 = vmatpush1.msra.mxu0 0.0
        %2333 = vmatprep.subr.mxu0 0.0
        %2334 = vmatpush1.msra.mxu0 0.0
        %2335 = vmatprep.subr.mxu0 0.0
        %2336 = vmatpush1.msra.mxu0 0.0
        %2337 = vmatprep.subr.mxu0 0.0
        %2338 = vmatpush1.msra.mxu0 0.0
        %2339 = vmatprep.subr.mxu0 0.0
        %2340 = vmatpush1.msra.mxu0 0.0
        %2341 = vmatprep.subr.mxu0 0.0
        %2342 = vmatpush1.msra.mxu0 0.0
        %2343 = vmatprep.subr.mxu0 0.0
        %2344 = vmatpush1.msra.mxu0 0.0
        %2345 = vmatprep.subr.mxu0 0.0
        %2346 = vmatpush1.msra.mxu0 0.0
        %2347 = vmatprep.subr.mxu0 0.0
        %2348 = vmatpush1.msra.mxu0 0.0
        %2349 = vmatprep.subr.mxu0 0.0
        %2350 = vmatpush1.msra.mxu0 0.0
        %2351 = vmatprep.subr.mxu0 0.0
        %2352 = vmatpush1.msra.mxu0 0.0
        %2353 = vmatprep.subr.mxu0 0.0
        %2354 = vmatpush1.msra.mxu0 0.0
        %2355 = vmatprep.subr.mxu0 0.0
        %2356 = vmatpush1.msra.mxu0 0.0
        %2357 = vmatprep.subr.mxu0 0.0
        %2358 = vmatpush1.msra.mxu0 0.0
        %2359 = vmatprep.subr.mxu0 0.0
        %2360 = vmatpush1.msra.mxu0 0.0
        %2361 = vmatprep.subr.mxu0 0.0
        %2362 = vmatpush1.msra.mxu0 0.0
        %2363 = vmatprep.mubr.f32.mxu0 0.0
        %2364 = vmatmul.mubr.f32.gmra.mrb[0].mxu0 %v2283
        %v2365 = vpop.f32.mrb[0].mxu0
        %v2366 = vadd.f32 %v2265, %v2365
        %v2367 = vpop.f32.mrb[0].mxu0
        %v2368 = vadd.f32 %v2265, %v2367
        %2369 = vdwg.mxu0
        %v2370 = vmul.f32 %v2366, %v2366
        %v2371 = vmul.f32 %v2368, %v2368
        %v2372 = vsel %vm282, %v2370, 0.0
        %v2373 = vrot.slane %v2372, 4
        %v2374 = vadd.f32 %v2372, %v2373
        %v2375 = vrot.slane %v2374, 2
        %v2376 = vadd.f32 %v2374, %v2375
        %v2377 = vrot.slane %v2376, 1
        %v2378 = vadd.f32 %v2376, %v2377
        %v2379 = vsel %vm282, %v2371, 0.0
        %v2380 = vrot.slane %v2379, 4
        %v2381 = vadd.f32 %v2379, %v2380
        %v2382 = vrot.slane %v2381, 2
        %v2383 = vadd.f32 %v2381, %v2382
        %v2384 = vrot.slane %v2383, 1
        %v2385 = vadd.f32 %v2383, %v2384
        %v2386 = vmax.f32 %v2378, 1e-24
        %v2387 = vmax.f32 %v2385, 1e-24
        %v2388 = vrsqrt.pop %v2386
        %v2389 = vrsqrt.pop %v2387
        %v2390 = vmul.f32 %v2366, %v2388
        %v2391 = vmul.f32 %v2368, %v2389
        %v2392 = vld [vmem:[%s6] sm:$0xf]
        %2394 = vset.pattern.permute.xlu0 0
        %2395 = vperm.xlu0 %2394, %v2392
        %v2396 = vpop.permute.xlu0 %2395
        %v2398 = vmul.f32 %v2390, %v2396
        %v2399 = vmul.f32 %v2391, %v2396
        %v2402 = vcombine.low %v2398, %v2399
        %2404 = vst [vmem:[%s271] sm:$0xff] %v2402
        %s2405 = sand.u32 %s181, 1
        %s2406 = scalar_lea.sflag [#allocation3], %s2405
        %s2407 = sand.u32 %s181, 1
        %s2408 = smul.addr %s2407, 8
        %s2409 = scalar_lea.vmem [#allocation2], %s2408
        // Predicated region
        $region49: #{tpu_custom_call.1} parent=47 // pred_check
          %p2410 = pneg %p191
        $region50: #{tpu_custom_call.1} parent=47 // pred_check_branch
          %2412 = sbr.rel (%p2410) target = $region52
        $region51: #{tpu_custom_call.1} parent=47 // pred_region
          %s2414 = ssub.s32 128, 128
          %2415 = vsyncadd %s2406, %s2414
          %s2416 = smul.addr %s21, 2
          %s2417 = smul.addr %s2416, 64
          %s2418 = scalar_lea.hbm %s7, %s2417
          %s2420 = sshll.u32 %s2409, 4
          %s2421 = int_to_ptr.vmem [resolvable:$true] %s2420
          %2423 = dma.vmem_to_hbm [thread:$0]  %s2421, 128, %s2418, %s2406
        $region52: #{tpu_custom_call.1} parent=47 // pred_fallthru
          _
      $region48: #{tpu_custom_call.1} parent=5 // pred_fallthru
        _
      %p2424 = scmp.le.s32.totalorder 2, %s16
      // Predicated region
      $region53: #{tpu_custom_call.1} parent=5 // pred_check
        %p2425 = pneg %p2424
      $region54: #{tpu_custom_call.1} parent=5 // pred_check_branch
        %2427 = sbr.rel (%p2425) target = $region56
      $region55: #{tpu_custom_call.1} parent=5 // pred_region
        %s2428 = ssub.s32 %s16, 2
        // Predicated region
        $region57: #{tpu_custom_call.1} parent=55 // pred_check
          %p2429 = pneg %p197
        $region58: #{tpu_custom_call.1} parent=55 // pred_check_branch
          %2431 = sbr.rel (%p2429) target = $region60
        $region59: #{tpu_custom_call.1} parent=55 // pred_region
          %s2432 = sand.u32 %s182, 1
          %s2433 = scalar_lea.sflag [#allocation3], %s2432
          %s2434 = sand.u32 %s182, 1
          %s2435 = smul.addr %s2434, 8
          %s2436 = scalar_lea.vmem [#allocation2], %s2435
          %2437 = dma.done %s2433, 128
        $region60: #{tpu_custom_call.1} parent=55 // pred_fallthru
          _
      $region56: #{tpu_custom_call.1} parent=5 // pred_fallthru
        _
    $region6: #{tpu_custom_call.1} parent=1 // loop_footer
      %s20 = sadd.s32 1, %s16
    $region7: #{tpu_custom_call.1} parent=1 // loop_footer_branch
      %15 = sbr.rel target = $region3
    $region8: #{tpu_custom_call.1} parent=1 // loop_exit
      _
    %2438 = vsyncpa [#allocation3], 1
    %s2439 = scalar_lea.sflag [#allocation3], 1
    %2440 = vsyncpa %s2439, 1

</llo_original>
